<compile_context>
chip_gen: v7x
topology: tpu7x:2x2x1
jax: 0.10.0
libtpu: 0.0.40
codegen_flags: <defaults>
</compile_context>

<pallas_src>
import functools

import jax
import jax.numpy as jnp
import numpy as np
from jax.experimental import pallas as pl
from jax.experimental.pallas import tpu as pltpu


# --------------------------------- kernel ------------------------------------

def _pg_kernel(x_ref, w_in_ref, b_in_ref, w_eff_ref, b_eff_ref,
               w_out_ref, b_out_ref, o_ref, tap_ref, *,
               num_layers, seq_len, num_f_maps, batch_per_step):
    T = seq_len
    F = num_f_maps
    Nb = batch_per_step
    L = num_layers
    NT = Nb * T

    # ---- 1x1 input conv -------------------------------------------------
    # x arrives bf16 (wrapper cast halves the HBM->VMEM input DMA); one
    # (F, D) @ (D, T) matmul per sample, assembled into the wide residual
    # stream f: (F, Nb*T) float32, channels on sublanes, time/batch on lanes.
    f = jnp.concatenate(
        [jnp.dot(w_in_ref[...], x_ref[nb], preferred_element_type=jnp.float32)
         for nb in range(Nb)], axis=1) + b_in_ref[...]

    # Per-sample time index, hoisted once (broadcast_in_dim is not CSE'd).
    local_t = jax.lax.broadcasted_iota(jnp.int32, (F, NT), 1) % T

    def shifted(a, s):
        # a[:, t + s] with zero padding at per-sample sequence boundaries.
        # Elementwise mask math stays f32 (v5e VPU has no bf16 support);
        # single compare per tap.  s is a static nonzero int.
        rolled = jnp.roll(a, -s, axis=1)
        valid = (local_t < T - s) if s > 0 else (local_t >= -s)
        return jnp.where(valid, rolled, 0.0)

    def stage(slot, val):
        # Stage a tap into VMEM scratch; cast to bf16 only at the MXU-operand
        # store (keeps elementwise work f32, moves tap pressure off vregs).
        tap_ref[slot * F:(slot + 1) * F, :] = val.astype(jnp.bfloat16)

    # TODO(synk): at production num_layers (MS-TCN++ uses 11) switch this
    # static unroll to lax.fori_loop with dynamic w_eff_ref/b_eff_ref reads and
    # dynamic-shift rolls to bound per-layer live ranges; taps already go
    # through VMEM scratch so only f / f_in stay live across the layer body.
    for i in range(L):
        d1 = 2 ** (L - 1 - i)
        d2 = 2 ** i
        f_in = f

        # conv_dilated_1 + conv_dilated_2 + conv_fusion folded offline into one
        # (F, K) @ (K, Nb*T) matmul over shifted taps of f.
        stage(0, f)
        stage(1, shifted(f, -d1))
        stage(2, shifted(f, d1))
        if d1 != d2:
            stage(3, shifted(f, -d2))
            stage(4, shifted(f, d2))
            n_tap = 5
        else:
            n_tap = 3   # equal dilations: duplicate taps folded offline (K=3F)
        K = n_tap * F

        fused = jnp.dot(w_eff_ref[i][:, :K], tap_ref[:K, :],
                        preferred_element_type=jnp.float32) + b_eff_ref[i]
        # TODO(synk): nn.Dropout is identity in eval/inference mode.
        f = jnp.maximum(fused, 0.0) + f_in

    # ---- 1x1 output conv (num_classes zero-padded to a sublane multiple) ----
    out = jnp.dot(w_out_ref[...], f.astype(jnp.bfloat16),
                  preferred_element_type=jnp.float32) + b_out_ref[...]
    for nb in range(Nb):
        o_ref[nb] = out[:, nb * T:(nb + 1) * T]     # lane-dense (C_pad, T) store


# -------------------------------- wrapper -------------------------------------

def prediction_generation_pallas(x, kp, *, num_layers, num_classes,
                                 batch_per_step=None):
    """x: (N, dim, T) float32 (PyTorch layout). Returns (N, num_classes, T)."""
    N, D, T = x.shape
    F = kp["w_in"].shape[0]
    C_pad = kp["w_out"].shape[0]

    if batch_per_step is None:
        # Widen the matmul lane dimension toward ~1024 lanes per grid step.
        target = max(1, 1024 // T)
        batch_per_step = 1
        for nb in range(min(N, target), 0, -1):
            if N % nb == 0:
                batch_per_step = nb
                break
    Nb = batch_per_step
    G = N // Nb

    # Halve the dominant input DMA; kernel accumulates in f32.  (In production
    # the activations would typically already arrive in bf16.)
    x = x.astype(jnp.bfloat16)

    kernel = functools.partial(_pg_kernel, num_layers=num_layers, seq_len=T,
                               num_f_maps=F, batch_per_step=Nb)

    def full_spec(a):
        n = a.ndim
        return pl.BlockSpec(a.shape, lambda g, n=n: (0,) * n)

    params = (kp["w_in"], kp["b_in"], kp["w_eff"], kp["b_eff"],
              kp["w_out"], kp["b_out"])

    # TODO(synk): for very long sequences add a second (parallel) grid axis
    # tiling T with per-layer halos = receptive field (also keeps v7x's second
    # TensorCore busy when N == 1); size T tiles / vmem_limit_bytes per
    # generation (64 MiB physical on v7x vs 128 MiB on v5e/v6e) and keep the
    # residual stream f resident in VMEM scratch across layers.  The demo
    # working set is tiny so one whole-sequence block per grid step is used.
    out_pad = pl.pallas_call(
        kernel,
        out_shape=jax.ShapeDtypeStruct((N, C_pad, T), jnp.float32),
        grid=(G,),
        in_specs=[pl.BlockSpec((Nb, D, T), lambda g: (g, 0, 0))]
                 + [full_spec(p) for p in params],
        out_specs=pl.BlockSpec((Nb, C_pad, T), lambda g: (g, 0, 0)),
        scratch_shapes=[pltpu.VMEM((5 * F, Nb * T), jnp.bfloat16)],
        compiler_params=pltpu.CompilerParams(
            dimension_semantics=("parallel",)),
    )(x, *params)

    return out_pad[:, :num_classes, :]


# ---------------- pure-JAX reference (mirrors the PyTorch module) -------------

def _conv1d_ref(x, w, b, dilation=1, padding=0):
    y = jax.lax.conv_general_dilated(
        x, w, window_strides=(1,), padding=[(padding, padding)],
        rhs_dilation=(dilation,), dimension_numbers=("NCH", "OIH", "NCH"),
        precision=jax.lax.Precision.HIGHEST)
    return y + b[None, :, None]


def reference_forward(x, tp, num_layers):
    f = _conv1d_ref(x, tp["w_in"], tp["b_in"])
    for i in range(num_layers):
        f_in = f
        d = 2 ** (num_layers - 1 - i)
        d1 = _conv1d_ref(f, tp["w_d1"][i], tp["b_d1"][i], dilation=d, padding=d)
        d2 = _conv1d_ref(f, tp["w_d2"][i], tp["b_d2"][i],
                         dilation=2 ** i, padding=2 ** i)
        cat = jnp.concatenate([d1, d2], axis=1)
        f = _conv1d_ref(cat, tp["w_fus"][i], tp["b_fus"][i])
        f = jax.nn.relu(f)
        f = f + f_in            # dropout = identity (eval mode)
    return _conv1d_ref(f, tp["w_out"], tp["b_out"])


# ---------------- parameter construction + offline weight folding -------------

def make_params(key, num_layers, num_f_maps, dim, num_classes):
    ks = jax.random.split(key, 10)
    s = 0.1
    torch_params = {
        "w_in":  s * jax.random.normal(ks[0], (num_f_maps, dim, 1), jnp.float32),
        "b_in":  s * jax.random.normal(ks[1], (num_f_maps,), jnp.float32),
        "w_d1":  s * jax.random.normal(ks[2], (num_layers, num_f_maps, num_f_maps, 3), jnp.float32),
        "b_d1":  s * jax.random.normal(ks[3], (num_layers, num_f_maps), jnp.float32),
        "w_d2":  s * jax.random.normal(ks[4], (num_layers, num_f_maps, num_f_maps, 3), jnp.float32),
        "b_d2":  s * jax.random.normal(ks[5], (num_layers, num_f_maps), jnp.float32),
        "w_fus": s * jax.random.normal(ks[6], (num_layers, num_f_maps, 2 * num_f_maps, 1), jnp.float32),
        "b_fus": s * jax.random.normal(ks[7], (num_layers, num_f_maps), jnp.float32),
        "w_out": s * jax.random.normal(ks[8], (num_classes, num_f_maps, 1), jnp.float32),
        "b_out": s * jax.random.normal(ks[9], (num_classes,), jnp.float32),
    }

    # Offline folding in float64 (exact): conv_fusion(cat(d1, d2)) with no
    # intermediate nonlinearity == one (F, 5F) matmul over the shifted taps
    # [center(merged), f[t-d1], f[t+d1], f[t-d2], f[t+d2]].  When d1 == d2 the
    # duplicate taps are merged into a (F, 3F) weight (zero-padded to 5F).
    tp64 = {k: np.asarray(v, dtype=np.float64) for k, v in torch_params.items()}
    F = num_f_maps
    L = num_layers
    w_eff = np.zeros((L, F, 5 * F), dtype=np.float64)
    b_eff = np.zeros((L, F), dtype=np.float64)
    for i in range(L):
        d1, d2 = 2 ** (L - 1 - i), 2 ** i
        wfus = tp64["w_fus"][i][..., 0]                   # (F, 2F)
        A, B = wfus[:, :F], wfus[:, F:]
        wd1, wd2 = tp64["w_d1"][i], tp64["w_d2"][i]       # (F, F, 3)
        center = A @ wd1[:, :, 1] + B @ wd2[:, :, 1]
        left1, right1 = A @ wd1[:, :, 0], A @ wd1[:, :, 2]
        left2, right2 = B @ wd2[:, :, 0], B @ wd2[:, :, 2]
        if d1 == d2:
            cols = [center, left1 + left2, right1 + right2,
                    np.zeros_like(center), np.zeros_like(center)]
        else:
            cols = [center, left1, right1, left2, right2]
        w_eff[i] = np.concatenate(cols, axis=1)
        b_eff[i] = A @ tp64["b_d1"][i] + B @ tp64["b_d2"][i] + tp64["b_fus"][i]

    # Pad num_classes to a sublane multiple (zero rows); wrapper slices back.
    C = num_classes
    C_pad = ((C + 7) // 8) * 8
    w_out_pad = np.zeros((C_pad, F), dtype=np.float64)
    w_out_pad[:C] = tp64["w_out"][:, :, 0]
    b_out_pad = np.zeros((C_pad, 1), dtype=np.float64)
    b_out_pad[:C, 0] = tp64["b_out"]

    kernel_params = {
        "w_in":  jnp.asarray(tp64["w_in"][:, :, 0], jnp.bfloat16),    # (F, D)
        "b_in":  jnp.asarray(tp64["b_in"][:, None], jnp.float32),     # (F, 1)
        "w_eff": jnp.asarray(w_eff, jnp.bfloat16),                    # (L, F, 5F)
        "b_eff": jnp.asarray(b_eff[:, :, None], jnp.float32),         # (L, F, 1)
        "w_out": jnp.asarray(w_out_pad, jnp.bfloat16),                # (C_pad, F)
        "b_out": jnp.asarray(b_out_pad, jnp.float32),                 # (C_pad, 1)
    }
    return torch_params, kernel_params


if __name__ == "__main__":
    num_layers, num_f_maps, dim, num_classes = 3, 32, 8, 10
    N, T = 2, 256

    key = jax.random.PRNGKey(0)
    k_x, k_p = jax.random.split(key)
    x = jax.random.normal(k_x, (N, dim, T), jnp.float32)   # PyTorch (N, C, T)

    torch_params, kernel_params = make_params(k_p, num_layers, num_f_maps,
                                              dim, num_classes)

    out = prediction_generation_pallas(x, kernel_params,
                                       num_layers=num_layers,
                                       num_classes=num_classes)
    out = jax.block_until_ready(out)

    ref = reference_forward(x, torch_params, num_layers)
    # bf16 matmul operands (incl. bf16 x) with f32 accumulation vs the f32
    # reference: tolerance loosened accordingly (~1e-2 worst case observed).
    np.testing.assert_allclose(np.asarray(out), np.asarray(ref),
                               rtol=5e-2, atol=5e-2)
    assert out.shape == (N, num_classes, T)

    print("KERNEL_OK")
</pallas_src>

<mosaic_0001>
module attributes {stable_mosaic.version = 11 : i64} {
  func.func @_pg_kernel(%arg0: i32, %arg1: memref<2x8x256xbf16, #tpu.memory_space<vmem>>, %arg2: memref<32x8xbf16, #tpu.memory_space<vmem>>, %arg3: memref<32x1xf32, #tpu.memory_space<vmem>>, %arg4: memref<3x32x160xbf16, #tpu.memory_space<vmem>>, %arg5: memref<3x32x1xf32, #tpu.memory_space<vmem>>, %arg6: memref<16x32xbf16, #tpu.memory_space<vmem>>, %arg7: memref<16x1xf32, #tpu.memory_space<vmem>>, %arg8: memref<2x16x256xf32, #tpu.memory_space<vmem>>, %arg9: memref<160x512xbf16, #tpu.memory_space<vmem>>) attributes {dimension_semantics = [#tpu.dimension_semantics<parallel>], iteration_bounds = array<i64: 1>, scalar_prefetch = 0 : i64, scratch_operands = 1 : i64, tpu.core_type = #tpu.core_type<tc>, window_params = [{transform_indices = @transform_0, window_bounds = array<i64: 2, 8, 256>}, {pipeline_mode = #tpu.pipeline_mode<synchronous>, transform_indices = @transform_1, window_bounds = array<i64: 32, 8>}, {pipeline_mode = #tpu.pipeline_mode<synchronous>, transform_indices = @transform_2, window_bounds = array<i64: 32, 1>}, {pipeline_mode = #tpu.pipeline_mode<synchronous>, transform_indices = @transform_3, window_bounds = array<i64: 3, 32, 160>}, {pipeline_mode = #tpu.pipeline_mode<synchronous>, transform_indices = @transform_4, window_bounds = array<i64: 3, 32, 1>}, {pipeline_mode = #tpu.pipeline_mode<synchronous>, transform_indices = @transform_5, window_bounds = array<i64: 16, 32>}, {pipeline_mode = #tpu.pipeline_mode<synchronous>, transform_indices = @transform_6, window_bounds = array<i64: 16, 1>}, {transform_indices = @transform_7, window_bounds = array<i64: 2, 16, 256>}]} {
    %c0 = arith.constant 0 : index
    %c0_0 = arith.constant 0 : index
    %0 = vector.load %arg2[%c0, %c0_0] : memref<32x8xbf16, #tpu.memory_space<vmem>>, vector<32x8xbf16>
    %c0_1 = arith.constant 0 : index
    %c0_2 = arith.constant 0 : index
    %c0_3 = arith.constant 0 : index
    %1 = vector.load %arg1[%c0_1, %c0_2, %c0_3] : memref<2x8x256xbf16, #tpu.memory_space<vmem>>, vector<1x8x256xbf16>
    %2 = vector.shape_cast %1 : vector<1x8x256xbf16> to vector<8x256xbf16>
    %cst = arith.constant dense<0.000000e+00> : vector<32x256xf32>
    %3 = tpu.matmul %0, %2, %cst {dimension_numbers = #tpu.dot_dimension_numbers<[1], [0], [0], [1], [0, 0, 1, 1], [], []>} : vector<32x8xbf16>, vector<8x256xbf16>, vector<32x256xf32> -> vector<32x256xf32>
    %c0_4 = arith.constant 0 : index
    %c0_5 = arith.constant 0 : index
    %4 = vector.load %arg2[%c0_4, %c0_5] : memref<32x8xbf16, #tpu.memory_space<vmem>>, vector<32x8xbf16>
    %c1 = arith.constant 1 : index
    %c0_6 = arith.constant 0 : index
    %c0_7 = arith.constant 0 : index
    %5 = vector.load %arg1[%c1, %c0_6, %c0_7] : memref<2x8x256xbf16, #tpu.memory_space<vmem>>, vector<1x8x256xbf16>
    %6 = vector.shape_cast %5 : vector<1x8x256xbf16> to vector<8x256xbf16>
    %cst_8 = arith.constant dense<0.000000e+00> : vector<32x256xf32>
    %7 = tpu.matmul %4, %6, %cst_8 {dimension_numbers = #tpu.dot_dimension_numbers<[1], [0], [0], [1], [0, 0, 1, 1], [], []>} : vector<32x8xbf16>, vector<8x256xbf16>, vector<32x256xf32> -> vector<32x256xf32>
    %8 = tpu.concatenate %3, %7 in 1 : vector<32x256xf32>, vector<32x256xf32> -> vector<32x512xf32>
    %c0_9 = arith.constant 0 : index
    %c0_10 = arith.constant 0 : index
    %9 = vector.load %arg3[%c0_9, %c0_10] : memref<32x1xf32, #tpu.memory_space<vmem>>, vector<32x1xf32>
    %10 = vector.broadcast %9 : vector<32x1xf32> to vector<32x512xf32>
    %11 = arith.addf %8, %10 : vector<32x512xf32>
    %12 = tpu.iota {dimensions = array<i32: 1>} : vector<32x512xi32>
    %c256_i32 = arith.constant 256 : i32
    %c0_i32 = arith.constant 0 : i32
    %13 = arith.cmpi eq, %c256_i32, %c0_i32 : i32
    %c1_i32 = arith.constant 1 : i32
    %14 = arith.select %13, %c1_i32, %c256_i32 : i32
    %15 = vector.broadcast %14 : i32 to vector<32x512xi32>
    %16 = arith.remsi %12, %15 : vector<32x512xi32>
    %c0_i32_11 = arith.constant 0 : i32
    %17 = vector.broadcast %c0_i32_11 : i32 to vector<32x512xi32>
    %18 = arith.cmpi ne, %16, %17 : vector<32x512xi32>
    %c0_i32_12 = arith.constant 0 : i32
    %19 = vector.broadcast %c0_i32_12 : i32 to vector<32x512xi32>
    %20 = arith.cmpi slt, %16, %19 : vector<32x512xi32>
    %c0_i32_13 = arith.constant 0 : i32
    %21 = arith.cmpi slt, %14, %c0_i32_13 : i32
    %22 = vector.broadcast %21 : i1 to vector<32x512xi1>
    %23 = vector.broadcast %22 : vector<32x512xi1> to vector<32x512xi1>
    %24 = arith.xori %20, %23 : vector<32x512xi1>
    %25 = arith.andi %24, %18 : vector<32x512xi1>
    %26 = vector.broadcast %14 : i32 to vector<32x512xi32>
    %27 = arith.addi %16, %26 : vector<32x512xi32>
    %28 = arith.select %25, %27, %16 : vector<32x512xi1>, vector<32x512xi32>
    %29 = arith.truncf %11 : vector<32x512xf32> to vector<32x512xbf16>
    %c0_14 = arith.constant 0 : index
    %c0_15 = arith.constant 0 : index
    %30 = vector.load %arg9[%c0_14, %c0_15] : memref<160x512xbf16, #tpu.memory_space<vmem>>, vector<32x512xbf16>
    tpu.vector_store %arg9[%c0_14, %c0_15], %29 {strides = array<i32>} : memref<160x512xbf16, #tpu.memory_space<vmem>>, vector<32x512xbf16>,
    %31 = vector.extract_strided_slice %11 {offsets = [0, 508], sizes = [32, 4], strides = [1, 1]} : vector<32x512xf32> to vector<32x4xf32>
    %32 = vector.extract_strided_slice %11 {offsets = [0, 0], sizes = [32, 508], strides = [1, 1]} : vector<32x512xf32> to vector<32x508xf32>
    %33 = tpu.concatenate %31, %32 in 1 : vector<32x4xf32>, vector<32x508xf32> -> vector<32x512xf32>
    %c4_i32 = arith.constant 4 : i32
    %34 = vector.broadcast %c4_i32 : i32 to vector<32x512xi32>
    %35 = arith.cmpi sge, %28, %34 : vector<32x512xi32>
    %cst_16 = arith.constant 0.000000e+00 : f32
    %36 = vector.broadcast %cst_16 : f32 to vector<32x512xf32>
    %37 = arith.select %35, %33, %36 : vector<32x512xi1>, vector<32x512xf32>
    %38 = arith.truncf %37 : vector<32x512xf32> to vector<32x512xbf16>
    %c32 = arith.constant 32 : index
    %c0_17 = arith.constant 0 : index
    %39 = vector.load %arg9[%c32, %c0_17] : memref<160x512xbf16, #tpu.memory_space<vmem>>, vector<32x512xbf16>
    tpu.vector_store %arg9[%c32, %c0_17], %38 {strides = array<i32>} : memref<160x512xbf16, #tpu.memory_space<vmem>>, vector<32x512xbf16>,
    %40 = vector.extract_strided_slice %11 {offsets = [0, 4], sizes = [32, 508], strides = [1, 1]} : vector<32x512xf32> to vector<32x508xf32>
    %41 = vector.extract_strided_slice %11 {offsets = [0, 0], sizes = [32, 4], strides = [1, 1]} : vector<32x512xf32> to vector<32x4xf32>
    %42 = tpu.concatenate %40, %41 in 1 : vector<32x508xf32>, vector<32x4xf32> -> vector<32x512xf32>
    %c252_i32 = arith.constant 252 : i32
    %43 = vector.broadcast %c252_i32 : i32 to vector<32x512xi32>
    %44 = arith.cmpi slt, %28, %43 : vector<32x512xi32>
    %cst_18 = arith.constant 0.000000e+00 : f32
    %45 = vector.broadcast %cst_18 : f32 to vector<32x512xf32>
    %46 = arith.select %44, %42, %45 : vector<32x512xi1>, vector<32x512xf32>
    %47 = arith.truncf %46 : vector<32x512xf32> to vector<32x512xbf16>
    %c64 = arith.constant 64 : index
    %c0_19 = arith.constant 0 : index
    %48 = vector.load %arg9[%c64, %c0_19] : memref<160x512xbf16, #tpu.memory_space<vmem>>, vector<32x512xbf16>
    tpu.vector_store %arg9[%c64, %c0_19], %47 {strides = array<i32>} : memref<160x512xbf16, #tpu.memory_space<vmem>>, vector<32x512xbf16>,
    %49 = vector.extract_strided_slice %11 {offsets = [0, 511], sizes = [32, 1], strides = [1, 1]} : vector<32x512xf32> to vector<32x1xf32>
    %50 = vector.extract_strided_slice %11 {offsets = [0, 0], sizes = [32, 511], strides = [1, 1]} : vector<32x512xf32> to vector<32x511xf32>
    %51 = tpu.concatenate %49, %50 in 1 : vector<32x1xf32>, vector<32x511xf32> -> vector<32x512xf32>
    %c1_i32_20 = arith.constant 1 : i32
    %52 = vector.broadcast %c1_i32_20 : i32 to vector<32x512xi32>
    %53 = arith.cmpi sge, %28, %52 : vector<32x512xi32>
    %cst_21 = arith.constant 0.000000e+00 : f32
    %54 = vector.broadcast %cst_21 : f32 to vector<32x512xf32>
    %55 = arith.select %53, %51, %54 : vector<32x512xi1>, vector<32x512xf32>
    %56 = arith.truncf %55 : vector<32x512xf32> to vector<32x512xbf16>
    %c96 = arith.constant 96 : index
    %c0_22 = arith.constant 0 : index
    %57 = vector.load %arg9[%c96, %c0_22] : memref<160x512xbf16, #tpu.memory_space<vmem>>, vector<32x512xbf16>
    tpu.vector_store %arg9[%c96, %c0_22], %56 {strides = array<i32>} : memref<160x512xbf16, #tpu.memory_space<vmem>>, vector<32x512xbf16>,
    %58 = vector.extract_strided_slice %11 {offsets = [0, 1], sizes = [32, 511], strides = [1, 1]} : vector<32x512xf32> to vector<32x511xf32>
    %59 = vector.extract_strided_slice %11 {offsets = [0, 0], sizes = [32, 1], strides = [1, 1]} : vector<32x512xf32> to vector<32x1xf32>
    %60 = tpu.concatenate %58, %59 in 1 : vector<32x511xf32>, vector<32x1xf32> -> vector<32x512xf32>
    %c255_i32 = arith.constant 255 : i32
    %61 = vector.broadcast %c255_i32 : i32 to vector<32x512xi32>
    %62 = arith.cmpi slt, %28, %61 : vector<32x512xi32>
    %cst_23 = arith.constant 0.000000e+00 : f32
    %63 = vector.broadcast %cst_23 : f32 to vector<32x512xf32>
    %64 = arith.select %62, %60, %63 : vector<32x512xi1>, vector<32x512xf32>
    %65 = arith.truncf %64 : vector<32x512xf32> to vector<32x512xbf16>
    %c128 = arith.constant 128 : index
    %c0_24 = arith.constant 0 : index
    %66 = vector.load %arg9[%c128, %c0_24] : memref<160x512xbf16, #tpu.memory_space<vmem>>, vector<32x512xbf16>
    tpu.vector_store %arg9[%c128, %c0_24], %65 {strides = array<i32>} : memref<160x512xbf16, #tpu.memory_space<vmem>>, vector<32x512xbf16>,
    %c0_25 = arith.constant 0 : index
    %c0_26 = arith.constant 0 : index
    %c0_27 = arith.constant 0 : index
    %67 = vector.load %arg4[%c0_25, %c0_26, %c0_27] : memref<3x32x160xbf16, #tpu.memory_space<vmem>>, vector<1x32x160xbf16>
    %68 = vector.shape_cast %67 : vector<1x32x160xbf16> to vector<32x160xbf16>
    %c0_28 = arith.constant 0 : index
    %c0_29 = arith.constant 0 : index
    %69 = vector.load %arg9[%c0_28, %c0_29] : memref<160x512xbf16, #tpu.memory_space<vmem>>, vector<160x512xbf16>
    %cst_30 = arith.constant dense<0.000000e+00> : vector<32x512xf32>
    %70 = tpu.matmul %68, %69, %cst_30 {dimension_numbers = #tpu.dot_dimension_numbers<[1], [0], [0], [1], [0, 0, 1, 1], [], []>} : vector<32x160xbf16>, vector<160x512xbf16>, vector<32x512xf32> -> vector<32x512xf32>
    %c0_31 = arith.constant 0 : index
    %c0_32 = arith.constant 0 : index
    %c0_33 = arith.constant 0 : index
    %71 = vector.load %arg5[%c0_31, %c0_32, %c0_33] : memref<3x32x1xf32, #tpu.memory_space<vmem>>, vector<1x32x1xf32>
    %72 = vector.shape_cast %71 : vector<1x32x1xf32> to vector<32x1xf32>
    %73 = vector.broadcast %72 : vector<32x1xf32> to vector<32x512xf32>
    %74 = arith.addf %70, %73 : vector<32x512xf32>
    %cst_34 = arith.constant 0.000000e+00 : f32
    %75 = vector.broadcast %cst_34 : f32 to vector<32x512xf32>
    %76 = arith.maximumf %74, %75 : vector<32x512xf32>
    %77 = arith.addf %76, %11 : vector<32x512xf32>
    %78 = arith.truncf %77 : vector<32x512xf32> to vector<32x512xbf16>
    %c0_35 = arith.constant 0 : index
    %c0_36 = arith.constant 0 : index
    %79 = vector.load %arg9[%c0_35, %c0_36] : memref<160x512xbf16, #tpu.memory_space<vmem>>, vector<32x512xbf16>
    tpu.vector_store %arg9[%c0_35, %c0_36], %78 {strides = array<i32>} : memref<160x512xbf16, #tpu.memory_space<vmem>>, vector<32x512xbf16>,
    %80 = vector.extract_strided_slice %77 {offsets = [0, 510], sizes = [32, 2], strides = [1, 1]} : vector<32x512xf32> to vector<32x2xf32>
    %81 = vector.extract_strided_slice %77 {offsets = [0, 0], sizes = [32, 510], strides = [1, 1]} : vector<32x512xf32> to vector<32x510xf32>
    %82 = tpu.concatenate %80, %81 in 1 : vector<32x2xf32>, vector<32x510xf32> -> vector<32x512xf32>
    %c2_i32 = arith.constant 2 : i32
    %83 = vector.broadcast %c2_i32 : i32 to vector<32x512xi32>
    %84 = arith.cmpi sge, %28, %83 : vector<32x512xi32>
    %cst_37 = arith.constant 0.000000e+00 : f32
    %85 = vector.broadcast %cst_37 : f32 to vector<32x512xf32>
    %86 = arith.select %84, %82, %85 : vector<32x512xi1>, vector<32x512xf32>
    %87 = arith.truncf %86 : vector<32x512xf32> to vector<32x512xbf16>
    %c32_38 = arith.constant 32 : index
    %c0_39 = arith.constant 0 : index
    %88 = vector.load %arg9[%c32_38, %c0_39] : memref<160x512xbf16, #tpu.memory_space<vmem>>, vector<32x512xbf16>
    tpu.vector_store %arg9[%c32_38, %c0_39], %87 {strides = array<i32>} : memref<160x512xbf16, #tpu.memory_space<vmem>>, vector<32x512xbf16>,
    %89 = vector.extract_strided_slice %77 {offsets = [0, 2], sizes = [32, 510], strides = [1, 1]} : vector<32x512xf32> to vector<32x510xf32>
    %90 = vector.extract_strided_slice %77 {offsets = [0, 0], sizes = [32, 2], strides = [1, 1]} : vector<32x512xf32> to vector<32x2xf32>
    %91 = tpu.concatenate %89, %90 in 1 : vector<32x510xf32>, vector<32x2xf32> -> vector<32x512xf32>
    %c254_i32 = arith.constant 254 : i32
    %92 = vector.broadcast %c254_i32 : i32 to vector<32x512xi32>
    %93 = arith.cmpi slt, %28, %92 : vector<32x512xi32>
    %cst_40 = arith.constant 0.000000e+00 : f32
    %94 = vector.broadcast %cst_40 : f32 to vector<32x512xf32>
    %95 = arith.select %93, %91, %94 : vector<32x512xi1>, vector<32x512xf32>
    %96 = arith.truncf %95 : vector<32x512xf32> to vector<32x512xbf16>
    %c64_41 = arith.constant 64 : index
    %c0_42 = arith.constant 0 : index
    %97 = vector.load %arg9[%c64_41, %c0_42] : memref<160x512xbf16, #tpu.memory_space<vmem>>, vector<32x512xbf16>
    tpu.vector_store %arg9[%c64_41, %c0_42], %96 {strides = array<i32>} : memref<160x512xbf16, #tpu.memory_space<vmem>>, vector<32x512xbf16>,
    %c1_43 = arith.constant 1 : index
    %c0_44 = arith.constant 0 : index
    %c0_45 = arith.constant 0 : index
    %98 = vector.load %arg4[%c1_43, %c0_44, %c0_45] : memref<3x32x160xbf16, #tpu.memory_space<vmem>>, vector<1x32x160xbf16>
    %99 = vector.shape_cast %98 : vector<1x32x160xbf16> to vector<32x160xbf16>
    %100 = vector.extract_strided_slice %99 {offsets = [0, 0], sizes = [32, 96], strides = [1, 1]} : vector<32x160xbf16> to vector<32x96xbf16>
    %c0_46 = arith.constant 0 : index
    %c0_47 = arith.constant 0 : index
    %101 = vector.load %arg9[%c0_46, %c0_47] : memref<160x512xbf16, #tpu.memory_space<vmem>>, vector<96x512xbf16>
    %cst_48 = arith.constant dense<0.000000e+00> : vector<32x512xf32>
    %102 = tpu.matmul %100, %101, %cst_48 {dimension_numbers = #tpu.dot_dimension_numbers<[1], [0], [0], [1], [0, 0, 1, 1], [], []>} : vector<32x96xbf16>, vector<96x512xbf16>, vector<32x512xf32> -> vector<32x512xf32>
    %c1_49 = arith.constant 1 : index
    %c0_50 = arith.constant 0 : index
    %c0_51 = arith.constant 0 : index
    %103 = vector.load %arg5[%c1_49, %c0_50, %c0_51] : memref<3x32x1xf32, #tpu.memory_space<vmem>>, vector<1x32x1xf32>
    %104 = vector.shape_cast %103 : vector<1x32x1xf32> to vector<32x1xf32>
    %105 = vector.broadcast %104 : vector<32x1xf32> to vector<32x512xf32>
    %106 = arith.addf %102, %105 : vector<32x512xf32>
    %cst_52 = arith.constant 0.000000e+00 : f32
    %107 = vector.broadcast %cst_52 : f32 to vector<32x512xf32>
    %108 = arith.maximumf %106, %107 : vector<32x512xf32>
    %109 = arith.addf %108, %77 : vector<32x512xf32>
    %110 = arith.truncf %109 : vector<32x512xf32> to vector<32x512xbf16>
    %c0_53 = arith.constant 0 : index
    %c0_54 = arith.constant 0 : index
    %111 = vector.load %arg9[%c0_53, %c0_54] : memref<160x512xbf16, #tpu.memory_space<vmem>>, vector<32x512xbf16>
    tpu.vector_store %arg9[%c0_53, %c0_54], %110 {strides = array<i32>} : memref<160x512xbf16, #tpu.memory_space<vmem>>, vector<32x512xbf16>,
    %112 = vector.extract_strided_slice %109 {offsets = [0, 511], sizes = [32, 1], strides = [1, 1]} : vector<32x512xf32> to vector<32x1xf32>
    %113 = vector.extract_strided_slice %109 {offsets = [0, 0], sizes = [32, 511], strides = [1, 1]} : vector<32x512xf32> to vector<32x511xf32>
    %114 = tpu.concatenate %112, %113 in 1 : vector<32x1xf32>, vector<32x511xf32> -> vector<32x512xf32>
    %c1_i32_55 = arith.constant 1 : i32
    %115 = vector.broadcast %c1_i32_55 : i32 to vector<32x512xi32>
    %116 = arith.cmpi sge, %28, %115 : vector<32x512xi32>
    %cst_56 = arith.constant 0.000000e+00 : f32
    %117 = vector.broadcast %cst_56 : f32 to vector<32x512xf32>
    %118 = arith.select %116, %114, %117 : vector<32x512xi1>, vector<32x512xf32>
    %119 = arith.truncf %118 : vector<32x512xf32> to vector<32x512xbf16>
    %c32_57 = arith.constant 32 : index
    %c0_58 = arith.constant 0 : index
    %120 = vector.load %arg9[%c32_57, %c0_58] : memref<160x512xbf16, #tpu.memory_space<vmem>>, vector<32x512xbf16>
    tpu.vector_store %arg9[%c32_57, %c0_58], %119 {strides = array<i32>} : memref<160x512xbf16, #tpu.memory_space<vmem>>, vector<32x512xbf16>,
    %121 = vector.extract_strided_slice %109 {offsets = [0, 1], sizes = [32, 511], strides = [1, 1]} : vector<32x512xf32> to vector<32x511xf32>
    %122 = vector.extract_strided_slice %109 {offsets = [0, 0], sizes = [32, 1], strides = [1, 1]} : vector<32x512xf32> to vector<32x1xf32>
    %123 = tpu.concatenate %121, %122 in 1 : vector<32x511xf32>, vector<32x1xf32> -> vector<32x512xf32>
    %c255_i32_59 = arith.constant 255 : i32
    %124 = vector.broadcast %c255_i32_59 : i32 to vector<32x512xi32>
    %125 = arith.cmpi slt, %28, %124 : vector<32x512xi32>
    %cst_60 = arith.constant 0.000000e+00 : f32
    %126 = vector.broadcast %cst_60 : f32 to vector<32x512xf32>
    %127 = arith.select %125, %123, %126 : vector<32x512xi1>, vector<32x512xf32>
    %128 = arith.truncf %127 : vector<32x512xf32> to vector<32x512xbf16>
    %c64_61 = arith.constant 64 : index
    %c0_62 = arith.constant 0 : index
    %129 = vector.load %arg9[%c64_61, %c0_62] : memref<160x512xbf16, #tpu.memory_space<vmem>>, vector<32x512xbf16>
    tpu.vector_store %arg9[%c64_61, %c0_62], %128 {strides = array<i32>} : memref<160x512xbf16, #tpu.memory_space<vmem>>, vector<32x512xbf16>,
    %130 = vector.extract_strided_slice %109 {offsets = [0, 508], sizes = [32, 4], strides = [1, 1]} : vector<32x512xf32> to vector<32x4xf32>
    %131 = vector.extract_strided_slice %109 {offsets = [0, 0], sizes = [32, 508], strides = [1, 1]} : vector<32x512xf32> to vector<32x508xf32>
    %132 = tpu.concatenate %130, %131 in 1 : vector<32x4xf32>, vector<32x508xf32> -> vector<32x512xf32>
    %c4_i32_63 = arith.constant 4 : i32
    %133 = vector.broadcast %c4_i32_63 : i32 to vector<32x512xi32>
    %134 = arith.cmpi sge, %28, %133 : vector<32x512xi32>
    %cst_64 = arith.constant 0.000000e+00 : f32
    %135 = vector.broadcast %cst_64 : f32 to vector<32x512xf32>
    %136 = arith.select %134, %132, %135 : vector<32x512xi1>, vector<32x512xf32>
    %137 = arith.truncf %136 : vector<32x512xf32> to vector<32x512xbf16>
    %c96_65 = arith.constant 96 : index
    %c0_66 = arith.constant 0 : index
    %138 = vector.load %arg9[%c96_65, %c0_66] : memref<160x512xbf16, #tpu.memory_space<vmem>>, vector<32x512xbf16>
    tpu.vector_store %arg9[%c96_65, %c0_66], %137 {strides = array<i32>} : memref<160x512xbf16, #tpu.memory_space<vmem>>, vector<32x512xbf16>,
    %139 = vector.extract_strided_slice %109 {offsets = [0, 4], sizes = [32, 508], strides = [1, 1]} : vector<32x512xf32> to vector<32x508xf32>
    %140 = vector.extract_strided_slice %109 {offsets = [0, 0], sizes = [32, 4], strides = [1, 1]} : vector<32x512xf32> to vector<32x4xf32>
    %141 = tpu.concatenate %139, %140 in 1 : vector<32x508xf32>, vector<32x4xf32> -> vector<32x512xf32>
    %c252_i32_67 = arith.constant 252 : i32
    %142 = vector.broadcast %c252_i32_67 : i32 to vector<32x512xi32>
    %143 = arith.cmpi slt, %28, %142 : vector<32x512xi32>
    %cst_68 = arith.constant 0.000000e+00 : f32
    %144 = vector.broadcast %cst_68 : f32 to vector<32x512xf32>
    %145 = arith.select %143, %141, %144 : vector<32x512xi1>, vector<32x512xf32>
    %146 = arith.truncf %145 : vector<32x512xf32> to vector<32x512xbf16>
    %c128_69 = arith.constant 128 : index
    %c0_70 = arith.constant 0 : index
    %147 = vector.load %arg9[%c128_69, %c0_70] : memref<160x512xbf16, #tpu.memory_space<vmem>>, vector<32x512xbf16>
    tpu.vector_store %arg9[%c128_69, %c0_70], %146 {strides = array<i32>} : memref<160x512xbf16, #tpu.memory_space<vmem>>, vector<32x512xbf16>,
    %c2 = arith.constant 2 : index
    %c0_71 = arith.constant 0 : index
    %c0_72 = arith.constant 0 : index
    %148 = vector.load %arg4[%c2, %c0_71, %c0_72] : memref<3x32x160xbf16, #tpu.memory_space<vmem>>, vector<1x32x160xbf16>
    %149 = vector.shape_cast %148 : vector<1x32x160xbf16> to vector<32x160xbf16>
    %c0_73 = arith.constant 0 : index
    %c0_74 = arith.constant 0 : index
    %150 = vector.load %arg9[%c0_73, %c0_74] : memref<160x512xbf16, #tpu.memory_space<vmem>>, vector<160x512xbf16>
    %cst_75 = arith.constant dense<0.000000e+00> : vector<32x512xf32>
    %151 = tpu.matmul %149, %150, %cst_75 {dimension_numbers = #tpu.dot_dimension_numbers<[1], [0], [0], [1], [0, 0, 1, 1], [], []>} : vector<32x160xbf16>, vector<160x512xbf16>, vector<32x512xf32> -> vector<32x512xf32>
    %c2_76 = arith.constant 2 : index
    %c0_77 = arith.constant 0 : index
    %c0_78 = arith.constant 0 : index
    %152 = vector.load %arg5[%c2_76, %c0_77, %c0_78] : memref<3x32x1xf32, #tpu.memory_space<vmem>>, vector<1x32x1xf32>
    %153 = vector.shape_cast %152 : vector<1x32x1xf32> to vector<32x1xf32>
    %154 = vector.broadcast %153 : vector<32x1xf32> to vector<32x512xf32>
    %155 = arith.addf %151, %154 : vector<32x512xf32>
    %cst_79 = arith.constant 0.000000e+00 : f32
    %156 = vector.broadcast %cst_79 : f32 to vector<32x512xf32>
    %157 = arith.maximumf %155, %156 : vector<32x512xf32>
    %158 = arith.addf %157, %109 : vector<32x512xf32>
    %c0_80 = arith.constant 0 : index
    %c0_81 = arith.constant 0 : index
    %159 = vector.load %arg6[%c0_80, %c0_81] : memref<16x32xbf16, #tpu.memory_space<vmem>>, vector<16x32xbf16>
    %160 = arith.truncf %158 : vector<32x512xf32> to vector<32x512xbf16>
    %cst_82 = arith.constant dense<0.000000e+00> : vector<16x512xf32>
    %161 = tpu.matmul %159, %160, %cst_82 {dimension_numbers = #tpu.dot_dimension_numbers<[1], [0], [0], [1], [0, 0, 1, 1], [], []>} : vector<16x32xbf16>, vector<32x512xbf16>, vector<16x512xf32> -> vector<16x512xf32>
    %c0_83 = arith.constant 0 : index
    %c0_84 = arith.constant 0 : index
    %162 = vector.load %arg7[%c0_83, %c0_84] : memref<16x1xf32, #tpu.memory_space<vmem>>, vector<16x1xf32>
    %163 = vector.broadcast %162 : vector<16x1xf32> to vector<16x512xf32>
    %164 = arith.addf %161, %163 : vector<16x512xf32>
    %165 = vector.extract_strided_slice %164 {offsets = [0, 0], sizes = [16, 256], strides = [1, 1]} : vector<16x512xf32> to vector<16x256xf32>
    %c0_85 = arith.constant 0 : index
    %c0_86 = arith.constant 0 : index
    %c0_87 = arith.constant 0 : index
    %166 = vector.load %arg8[%c0_85, %c0_86, %c0_87] : memref<2x16x256xf32, #tpu.memory_space<vmem>>, vector<1x16x256xf32>
    %167 = vector.shape_cast %166 : vector<1x16x256xf32> to vector<16x256xf32>
    %168 = vector.shape_cast %165 : vector<16x256xf32> to vector<1x16x256xf32>
    tpu.vector_store %arg8[%c0_85, %c0_86, %c0_87], %168 {strides = array<i32>} : memref<2x16x256xf32, #tpu.memory_space<vmem>>, vector<1x16x256xf32>,
    %169 = vector.extract_strided_slice %164 {offsets = [0, 256], sizes = [16, 256], strides = [1, 1]} : vector<16x512xf32> to vector<16x256xf32>
    %c1_88 = arith.constant 1 : index
    %c0_89 = arith.constant 0 : index
    %c0_90 = arith.constant 0 : index
    %170 = vector.load %arg8[%c1_88, %c0_89, %c0_90] : memref<2x16x256xf32, #tpu.memory_space<vmem>>, vector<1x16x256xf32>
    %171 = vector.shape_cast %170 : vector<1x16x256xf32> to vector<16x256xf32>
    %172 = vector.shape_cast %169 : vector<16x256xf32> to vector<1x16x256xf32>
    tpu.vector_store %arg8[%c1_88, %c0_89, %c0_90], %172 {strides = array<i32>} : memref<2x16x256xf32, #tpu.memory_space<vmem>>, vector<1x16x256xf32>,
    return
  }
  func.func @transform_0(%arg0: i32) -> (i32, i32, i32) {
    %c0_i32 = arith.constant 0 : i32
    %c0_i32_0 = arith.constant 0 : i32
    %c0_i32_1 = arith.constant 0 : i32
    return %arg0, %c0_i32, %c0_i32_0 : i32, i32, i32
  }
  func.func @transform_1(%arg0: i32) -> (i32, i32) {
    %c0_i32 = arith.constant 0 : i32
    %c0_i32_0 = arith.constant 0 : i32
    %c0_i32_1 = arith.constant 0 : i32
    return %c0_i32, %c0_i32_0 : i32, i32
  }
  func.func @transform_2(%arg0: i32) -> (i32, i32) {
    %c0_i32 = arith.constant 0 : i32
    %c0_i32_0 = arith.constant 0 : i32
    %c0_i32_1 = arith.constant 0 : i32
    return %c0_i32, %c0_i32_0 : i32, i32
  }
  func.func @transform_3(%arg0: i32) -> (i32, i32, i32) {
    %c0_i32 = arith.constant 0 : i32
    %c0_i32_0 = arith.constant 0 : i32
    %c0_i32_1 = arith.constant 0 : i32
    %c0_i32_2 = arith.constant 0 : i32
    return %c0_i32, %c0_i32_0, %c0_i32_1 : i32, i32, i32
  }
  func.func @transform_4(%arg0: i32) -> (i32, i32, i32) {
    %c0_i32 = arith.constant 0 : i32
    %c0_i32_0 = arith.constant 0 : i32
    %c0_i32_1 = arith.constant 0 : i32
    %c0_i32_2 = arith.constant 0 : i32
    return %c0_i32, %c0_i32_0, %c0_i32_1 : i32, i32, i32
  }
  func.func @transform_5(%arg0: i32) -> (i32, i32) {
    %c0_i32 = arith.constant 0 : i32
    %c0_i32_0 = arith.constant 0 : i32
    %c0_i32_1 = arith.constant 0 : i32
    return %c0_i32, %c0_i32_0 : i32, i32
  }
  func.func @transform_6(%arg0: i32) -> (i32, i32) {
    %c0_i32 = arith.constant 0 : i32
    %c0_i32_0 = arith.constant 0 : i32
    %c0_i32_1 = arith.constant 0 : i32
    return %c0_i32, %c0_i32_0 : i32, i32
  }
  func.func @transform_7(%arg0: i32) -> (i32, i32, i32) {
    %c0_i32 = arith.constant 0 : i32
    %c0_i32_0 = arith.constant 0 : i32
    %c0_i32_1 = arith.constant 0 : i32
    return %arg0, %c0_i32, %c0_i32_0 : i32, i32, i32
  }
}

</mosaic_0001>

<llo_original>
// kernel: tpu_custom_call.1
$region0: #{tpu_custom_call.1}
  #allocation0 [shape = 'u32[]', space=smem, size = 0x4, offset = 0x4, fixed_abs, tag = 'smem constant byte address 0x4 - core index']
  #allocation1 [shape = 'u32[144,128]{1,0:T(1,128)}', space=vmem, size = 0x12000, scoped, tag = 'internal scratch']
  #allocation2 [shape = 'bf16[160,512]{1,0:T(16,128)(2,1)}', space=vmem, size = 0x28000, scoped, tag = 'scratch operand']
  %s0 = inlined_call_operand.vmem [shape: bf16[2,8,256], index: 0, kind: input, shape index: {}]
  %s1 = inlined_call_operand.vmem [shape: bf16[32,8], index: 1, kind: input, shape index: {}]
  %s2 = inlined_call_operand.vmem [shape: f32[32,1], index: 2, kind: input, shape index: {}]
  %s3 = inlined_call_operand.vmem [shape: bf16[3,32,160], index: 3, kind: input, shape index: {}]
  %s4 = inlined_call_operand.vmem [shape: f32[3,32,1], index: 4, kind: input, shape index: {}]
  %s5 = inlined_call_operand.vmem [shape: bf16[16,32], index: 5, kind: input, shape index: {}]
  %s6 = inlined_call_operand.vmem [shape: f32[16,1], index: 6, kind: input, shape index: {}]
  %s7 = inlined_call_operand.hbm [shape: f32[2,16,256], index: 7, kind: output, shape index: {}]
  %s8 = sld [smem:[#allocation0]]
  $region38: #{tpu_custom_call.1} parent=0
    _
  %s10 = ssub.s32 1, %s8
  %s11 = scalar_select 0, %s10, %s8
  $region1: #{tpu_custom_call.1} parent=0
    #allocation3 [shape = 'u8[32768]{0}', space=vmem, size = 0x8000, scoped, tag = 'output window, operand 0, single buffered']
    #allocation4 [shape = 's32[1]{0}', space=sflag, size = 0x4, scoped, tag = 'scoped memory for tpu_custom_call.1']
    %12 = vsyncpa [#allocation4], 0
    // Predicated region
    $region2: #{tpu_custom_call.1} parent=1 // pred_check
      _
    $region3: #{tpu_custom_call.1} parent=1 // pred_check_branch
      %14 = sbr.rel (0) target = $region5
    $region4: #{tpu_custom_call.1} parent=1 // pred_region
      _
    $region5: #{tpu_custom_call.1} parent=1 // pred_fallthru
      _
    // Predicated region
    $region6: #{tpu_custom_call.1} parent=1 // pred_check
      _
    $region7: #{tpu_custom_call.1} parent=1 // pred_check_branch
      %16 = sbr.rel (0) target = $region9
    $region8: #{tpu_custom_call.1} parent=1 // pred_region
      _
    $region9: #{tpu_custom_call.1} parent=1 // pred_fallthru
      _
    // Predicated region
    $region10: #{tpu_custom_call.1} parent=1 // pred_check
      _
    $region11: #{tpu_custom_call.1} parent=1 // pred_check_branch
      %18 = sbr.rel (0) target = $region13
    $region12: #{tpu_custom_call.1} parent=1 // pred_region
      _
    $region13: #{tpu_custom_call.1} parent=1 // pred_fallthru
      _
    // Predicated region
    $region14: #{tpu_custom_call.1} parent=1 // pred_check
      _
    $region15: #{tpu_custom_call.1} parent=1 // pred_check_branch
      %20 = sbr.rel (0) target = $region17
    $region16: #{tpu_custom_call.1} parent=1 // pred_region
      _
    $region17: #{tpu_custom_call.1} parent=1 // pred_fallthru
      _
    // Predicated region
    $region18: #{tpu_custom_call.1} parent=1 // pred_check
      _
    $region19: #{tpu_custom_call.1} parent=1 // pred_check_branch
      %22 = sbr.rel (0) target = $region21
    $region20: #{tpu_custom_call.1} parent=1 // pred_region
      _
    $region21: #{tpu_custom_call.1} parent=1 // pred_fallthru
      _
    // Predicated region
    $region22: #{tpu_custom_call.1} parent=1 // pred_check
      _
    $region23: #{tpu_custom_call.1} parent=1 // pred_check_branch
      %24 = sbr.rel (0) target = $region25
    $region24: #{tpu_custom_call.1} parent=1 // pred_region
      _
    $region25: #{tpu_custom_call.1} parent=1 // pred_fallthru
      _
    // Predicated region
    $region26: #{tpu_custom_call.1} parent=1 // pred_check
      _
    $region27: #{tpu_custom_call.1} parent=1 // pred_check_branch
      %26 = sbr.rel (0) target = $region29
    $region28: #{tpu_custom_call.1} parent=1 // pred_region
      _
    $region29: #{tpu_custom_call.1} parent=1 // pred_fallthru
      _
    %v28 = vld [vmem:[%s1] sm:$0xf]
    %v29 = vld [vmem:[%s1 + $0x4] sm:$0xf]
    %v30 = vld [vmem:[%s1 + $0x8] sm:$0xf]
    %v31 = vld [vmem:[%s1 + $0xc] sm:$0xf]
    %v32 = vld [vmem:[%s0] sm:$0xff]
    %v37 = vunpack.c.l.b16 %v28
    %v38 = vunpack.c.l.b16 %v29
    %v39 = vunpack.c.l.b16 %v30
    %v40 = vunpack.c.l.b16 %v31
    %v41 = vpack.c.b16 %v38, %v37
    %v42 = vpack.c.b16 %v40, %v39
    %v44 = vunpack.c.l.b16 %v32
    %v45 = vunpack.c.h.b16 %v32
    %v46 = vpack.c.b16 %v44, %v44
    %v47 = vpack.c.b16 %v45, %v45
    %vm48 = vcmask 64512
    %v50 = vsel %vm48, %v41, 0
    %v53 = vsel %vm48, %v42, 0
    %vm55 = vcmask 1043456
    %v57 = vsel %vm55, %v46, 0
    %v60 = vsel %vm55, %v47, 0
    %62 = vmatprep.subr.bf16.mxu0 %v60
    %63 = vmatpush1.bf16.msra.mxu0 %v57
    %64 = vmatprep.subr.bf16.mxu0 0
    %65 = vmatpush1.bf16.msra.mxu0 0
    %66 = vmatprep.subr.bf16.mxu0 0
    %67 = vmatpush1.bf16.msra.mxu0 0
    %68 = vmatprep.subr.bf16.mxu0 0
    %69 = vmatpush1.bf16.msra.mxu0 0
    %70 = vmatprep.subr.bf16.mxu0 0
    %71 = vmatpush1.bf16.msra.mxu0 0
    %72 = vmatprep.subr.bf16.mxu0 0
    %73 = vmatpush1.bf16.msra.mxu0 0
    %74 = vmatprep.subr.bf16.mxu0 0
    %75 = vmatpush1.bf16.msra.mxu0 0
    %76 = vmatprep.subr.bf16.mxu0 0
    %77 = vmatpush1.bf16.msra.mxu0 0
    %78 = vmatprep.subr.bf16.mxu0 0
    %79 = vmatpush1.bf16.msra.mxu0 0
    %80 = vmatprep.subr.bf16.mxu0 0
    %81 = vmatpush1.bf16.msra.mxu0 0
    %82 = vmatprep.subr.bf16.mxu0 0
    %83 = vmatpush1.bf16.msra.mxu0 0
    %84 = vmatprep.subr.bf16.mxu0 0
    %85 = vmatpush1.bf16.msra.mxu0 0
    %86 = vmatprep.subr.bf16.mxu0 0
    %87 = vmatpush1.bf16.msra.mxu0 0
    %88 = vmatprep.subr.bf16.mxu0 0
    %89 = vmatpush1.bf16.msra.mxu0 0
    %90 = vmatprep.subr.bf16.mxu0 0
    %91 = vmatpush1.bf16.msra.mxu0 0
    %92 = vmatprep.subr.bf16.mxu0 0
    %93 = vmatpush1.bf16.msra.mxu0 0
    %94 = vmatprep.mubr.bf16.mxu0 0
    %95 = vmatmul.mubr.bf16.gmra.mrb[0].mxu0 %v50
    %v96 = vpop.f32.mrb[0].mxu0
    %v97 = vadd.f32 0.0, %v96
    %v98 = vpop.f32.mrb[0].mxu0
    %v99 = vadd.f32 0.0, %v98
    %v100 = vpop.f32.mrb[0].mxu0
    %v101 = vadd.f32 0.0, %v100
    %v102 = vpop.f32.mrb[0].mxu0
    %v103 = vadd.f32 0.0, %v102
    %104 = vmatprep.mubr.bf16.mxu0 0
    %105 = vmatmul.mubr.bf16.gmra.mrb[0].mxu0 %v53
    %v106 = vpop.f32.mrb[0].mxu0
    %v107 = vadd.f32 0.0, %v106
    %v108 = vpop.f32.mrb[0].mxu0
    %v109 = vadd.f32 0.0, %v108
    %v110 = vpop.f32.mrb[0].mxu0
    %v111 = vadd.f32 0.0, %v110
    %v112 = vpop.f32.mrb[0].mxu0
    %v113 = vadd.f32 0.0, %v112
    %114 = vdwg.mxu0
    %s115 = scalar_lea.vmem %s0, 8
    %v116 = vld [vmem:[%s115] sm:$0xff]
    %v118 = vunpack.c.l.b16 %v116
    %v119 = vunpack.c.h.b16 %v116
    %v120 = vpack.c.b16 %v118, %v118
    %v121 = vpack.c.b16 %v119, %v119
    %v123 = vsel %vm55, %v120, 0
    %v126 = vsel %vm55, %v121, 0
    %128 = vmatprep.subr.bf16.mxu0 %v126
    %129 = vmatpush1.bf16.msra.mxu0 %v123
    %130 = vmatprep.subr.bf16.mxu0 0
    %131 = vmatpush1.bf16.msra.mxu0 0
    %132 = vmatprep.subr.bf16.mxu0 0
    %133 = vmatpush1.bf16.msra.mxu0 0
    %134 = vmatprep.subr.bf16.mxu0 0
    %135 = vmatpush1.bf16.msra.mxu0 0
    %136 = vmatprep.subr.bf16.mxu0 0
    %137 = vmatpush1.bf16.msra.mxu0 0
    %138 = vmatprep.subr.bf16.mxu0 0
    %139 = vmatpush1.bf16.msra.mxu0 0
    %140 = vmatprep.subr.bf16.mxu0 0
    %141 = vmatpush1.bf16.msra.mxu0 0
    %142 = vmatprep.subr.bf16.mxu0 0
    %143 = vmatpush1.bf16.msra.mxu0 0
    %144 = vmatprep.subr.bf16.mxu0 0
    %145 = vmatpush1.bf16.msra.mxu0 0
    %146 = vmatprep.subr.bf16.mxu0 0
    %147 = vmatpush1.bf16.msra.mxu0 0
    %148 = vmatprep.subr.bf16.mxu0 0
    %149 = vmatpush1.bf16.msra.mxu0 0
    %150 = vmatprep.subr.bf16.mxu0 0
    %151 = vmatpush1.bf16.msra.mxu0 0
    %152 = vmatprep.subr.bf16.mxu0 0
    %153 = vmatpush1.bf16.msra.mxu0 0
    %154 = vmatprep.subr.bf16.mxu0 0
    %155 = vmatpush1.bf16.msra.mxu0 0
    %156 = vmatprep.subr.bf16.mxu0 0
    %157 = vmatpush1.bf16.msra.mxu0 0
    %158 = vmatprep.subr.bf16.mxu0 0
    %159 = vmatpush1.bf16.msra.mxu0 0
    %160 = vmatprep.mubr.bf16.mxu0 0
    %161 = vmatmul.mubr.bf16.gmra.mrb[0].mxu0 %v50
    %v162 = vpop.f32.mrb[0].mxu0
    %v163 = vadd.f32 0.0, %v162
    %v164 = vpop.f32.mrb[0].mxu0
    %v165 = vadd.f32 0.0, %v164
    %v166 = vpop.f32.mrb[0].mxu0
    %v167 = vadd.f32 0.0, %v166
    %v168 = vpop.f32.mrb[0].mxu0
    %v169 = vadd.f32 0.0, %v168
    %170 = vmatprep.mubr.bf16.mxu0 0
    %171 = vmatmul.mubr.bf16.gmra.mrb[0].mxu0 %v53
    %v172 = vpop.f32.mrb[0].mxu0
    %v173 = vadd.f32 0.0, %v172
    %v174 = vpop.f32.mrb[0].mxu0
    %v175 = vadd.f32 0.0, %v174
    %v176 = vpop.f32.mrb[0].mxu0
    %v177 = vadd.f32 0.0, %v176
    %v178 = vpop.f32.mrb[0].mxu0
    %v179 = vadd.f32 0.0, %v178
    %180 = vdwg.mxu0
    %v181 = vld [vmem:[%s2] sm:$0xff]
    %v182 = vld [vmem:[%s2 + $0x8] sm:$0xff]
    %v183 = vld [vmem:[%s2 + $0x10] sm:$0xff]
    %v184 = vld [vmem:[%s2 + $0x18] sm:$0xff]
    %186 = vset.pattern.permute.xlu0 0
    %187 = vperm.xlu0 %186, %v181
    %v188 = vpop.permute.xlu0 %187
    %191 = vset.pattern.permute.xlu0 0
    %192 = vperm.xlu0 %191, %v182
    %v193 = vpop.permute.xlu0 %192
    %196 = vset.pattern.permute.xlu0 0
    %197 = vperm.xlu0 %196, %v183
    %v198 = vpop.permute.xlu0 %197
    %201 = vset.pattern.permute.xlu0 0
    %202 = vperm.xlu0 %201, %v184
    %v203 = vpop.permute.xlu0 %202
    %v205 = vadd.f32 %v97, %v188
    %v206 = vadd.f32 %v99, %v188
    %v207 = vadd.f32 %v163, %v188
    %v208 = vadd.f32 %v165, %v188
    %v209 = vadd.f32 %v101, %v193
    %v210 = vadd.f32 %v103, %v193
    %v211 = vadd.f32 %v167, %v193
    %v212 = vadd.f32 %v169, %v193
    %v213 = vadd.f32 %v107, %v198
    %v214 = vadd.f32 %v109, %v198
    %v215 = vadd.f32 %v173, %v198
    %v216 = vadd.f32 %v175, %v198
    %v217 = vadd.f32 %v111, %v203
    %v218 = vadd.f32 %v113, %v203
    %v219 = vadd.f32 %v177, %v203
    %v220 = vadd.f32 %v179, %v203
    %v221 = vlaneseq
    %v222 = vand.u32 %v221, 127
    %v223 = vadd.s32 %v222, 128
    %v224 = vadd.s32 %v222, 256
    %v225 = vadd.s32 %v222, 384
    %vm226 = vcmp.lt.s32.totalorder %v222, 0
    %v227 = vsub.s32 0, %v222
    %v228 = vsel %vm226, %v227, %v222
    %v229 = vshrl.u32 %v228, 8
    %v230 = vand.u32 %v228, 255
    %v231 = vsub.s32 0, %v230
    %v232 = vsel %vm226, %v231, %v230
    %vm233 = vcmp.lt.s32.totalorder %v223, 0
    %v234 = vsub.s32 0, %v223
    %v235 = vsel %vm233, %v234, %v223
    %v236 = vshrl.u32 %v235, 8
    %v237 = vand.u32 %v235, 255
    %v238 = vsub.s32 0, %v237
    %v239 = vsel %vm233, %v238, %v237
    %vm240 = vcmp.lt.s32.totalorder %v224, 0
    %v241 = vsub.s32 0, %v224
    %v242 = vsel %vm240, %v241, %v224
    %v243 = vshrl.u32 %v242, 8
    %v244 = vand.u32 %v242, 255
    %v245 = vsub.s32 0, %v244
    %v246 = vsel %vm240, %v245, %v244
    %vm247 = vcmp.lt.s32.totalorder %v225, 0
    %v248 = vsub.s32 0, %v225
    %v249 = vsel %vm247, %v248, %v225
    %v250 = vshrl.u32 %v249, 8
    %v251 = vand.u32 %v249, 255
    %v252 = vsub.s32 0, %v251
    %v253 = vsel %vm247, %v252, %v251
    %vm254 = vcmp.ne.s32.totalorder %v232, 0
    %vm255 = vcmp.ne.s32.totalorder %v239, 0
    %vm256 = vcmp.ne.s32.totalorder %v246, 0
    %vm257 = vcmp.ne.s32.totalorder %v253, 0
    %vm258 = vcmp.lt.s32.totalorder %v232, 0
    %vm259 = vcmp.lt.s32.totalorder %v239, 0
    %vm260 = vcmp.lt.s32.totalorder %v246, 0
    %vm261 = vcmp.lt.s32.totalorder %v253, 0
    %vm262 = vmand %vm258, %vm254
    %vm263 = vmand %vm259, %vm255
    %vm264 = vmand %vm260, %vm256
    %vm265 = vmand %vm261, %vm257
    %v266 = vadd.s32 %v232, 256
    %v267 = vadd.s32 %v239, 256
    %v268 = vadd.s32 %v246, 256
    %v269 = vadd.s32 %v253, 256
    %v270 = vsel %vm262, %v266, %v232
    %v271 = vsel %vm263, %v267, %v239
    %v272 = vsel %vm264, %v268, %v246
    %v273 = vsel %vm265, %v269, %v253
    %v274 = vpack.c.bf16 %v209, %v205
    %v275 = vpack.c.bf16 %v210, %v206
    %v276 = vpack.c.bf16 %v211, %v207
    %v277 = vpack.c.bf16 %v212, %v208
    %v278 = vpack.c.bf16 %v217, %v213
    %v279 = vpack.c.bf16 %v218, %v214
    %v280 = vpack.c.bf16 %v219, %v215
    %v281 = vpack.c.bf16 %v220, %v216
    %282 = vst [vmem:[#allocation2] sm:$0xff] %v274
    %283 = vst [vmem:[#allocation2 + $0x8] sm:$0xff] %v275
    %284 = vst [vmem:[#allocation2 + $0x10] sm:$0xff] %v276
    %285 = vst [vmem:[#allocation2 + $0x18] sm:$0xff] %v277
    %286 = vst [vmem:[#allocation2 + $0x20] sm:$0xff] %v278
    %287 = vst [vmem:[#allocation2 + $0x28] sm:$0xff] %v279
    %288 = vst [vmem:[#allocation2 + $0x30] sm:$0xff] %v280
    %289 = vst [vmem:[#allocation2 + $0x38] sm:$0xff] %v281
    %294 = vrot.lane.b32.xlu0 %v208, 4
    %v295 = vpop.permute.xlu0 %294
    %296 = vrot.lane.b32.xlu0 %v212, 4
    %v297 = vpop.permute.xlu0 %296
    %298 = vrot.lane.b32.xlu0 %v216, 4
    %v299 = vpop.permute.xlu0 %298
    %300 = vrot.lane.b32.xlu0 %v220, 4
    %v301 = vpop.permute.xlu0 %300
    %318 = vrot.lane.b32.xlu0 %v205, 4
    %v319 = vpop.permute.xlu0 %318
    %320 = vrot.lane.b32.xlu0 %v206, 4
    %v321 = vpop.permute.xlu0 %320
    %322 = vrot.lane.b32.xlu0 %v207, 4
    %v323 = vpop.permute.xlu0 %322
    %324 = vrot.lane.b32.xlu0 %v209, 4
    %v325 = vpop.permute.xlu0 %324
    %326 = vrot.lane.b32.xlu0 %v210, 4
    %v327 = vpop.permute.xlu0 %326
    %328 = vrot.lane.b32.xlu0 %v211, 4
    %v329 = vpop.permute.xlu0 %328
    %330 = vrot.lane.b32.xlu0 %v213, 4
    %v331 = vpop.permute.xlu0 %330
    %332 = vrot.lane.b32.xlu0 %v214, 4
    %v333 = vpop.permute.xlu0 %332
    %334 = vrot.lane.b32.xlu0 %v215, 4
    %v335 = vpop.permute.xlu0 %334
    %336 = vrot.lane.b32.xlu0 %v217, 4
    %v337 = vpop.permute.xlu0 %336
    %338 = vrot.lane.b32.xlu0 %v218, 4
    %v339 = vpop.permute.xlu0 %338
    %340 = vrot.lane.b32.xlu0 %v219, 4
    %v341 = vpop.permute.xlu0 %340
    %vm342 = vcmask 31744
    %v343 = vsel %vm342, %v319, %v321
    %v344 = vsel %vm342, %v321, %v323
    %v345 = vsel %vm342, %v323, %v295
    %v346 = vsel %vm342, %v325, %v327
    %v347 = vsel %vm342, %v327, %v329
    %v348 = vsel %vm342, %v329, %v297
    %v349 = vsel %vm342, %v331, %v333
    %v350 = vsel %vm342, %v333, %v335
    %v351 = vsel %vm342, %v335, %v299
    %v352 = vsel %vm342, %v337, %v339
    %v353 = vsel %vm342, %v339, %v341
    %v354 = vsel %vm342, %v341, %v301
    %v371 = vsel %vm342, %v295, %v319
    %v372 = vsel %vm342, %v297, %v325
    %v373 = vsel %vm342, %v299, %v331
    %v374 = vsel %vm342, %v301, %v337
    %vm375 = vcmp.ge.s32.totalorder %v270, 4
    %vm376 = vcmp.ge.s32.totalorder %v271, 4
    %vm377 = vcmp.ge.s32.totalorder %v272, 4
    %vm378 = vcmp.ge.s32.totalorder %v273, 4
    %v379 = vsel %vm375, %v371, 0.0
    %v380 = vsel %vm376, %v343, 0.0
    %v381 = vsel %vm377, %v344, 0.0
    %v382 = vsel %vm378, %v345, 0.0
    %v383 = vsel %vm375, %v372, 0.0
    %v384 = vsel %vm376, %v346, 0.0
    %v385 = vsel %vm377, %v347, 0.0
    %v386 = vsel %vm378, %v348, 0.0
    %v387 = vsel %vm375, %v373, 0.0
    %v388 = vsel %vm376, %v349, 0.0
    %v389 = vsel %vm377, %v350, 0.0
    %v390 = vsel %vm378, %v351, 0.0
    %v391 = vsel %vm375, %v374, 0.0
    %v392 = vsel %vm376, %v352, 0.0
    %v393 = vsel %vm377, %v353, 0.0
    %v394 = vsel %vm378, %v354, 0.0
    %v395 = vpack.c.bf16 %v383, %v379
    %v396 = vpack.c.bf16 %v384, %v380
    %v397 = vpack.c.bf16 %v385, %v381
    %v398 = vpack.c.bf16 %v386, %v382
    %v399 = vpack.c.bf16 %v391, %v387
    %v400 = vpack.c.bf16 %v392, %v388
    %v401 = vpack.c.bf16 %v393, %v389
    %v402 = vpack.c.bf16 %v394, %v390
    %403 = vst [vmem:[#allocation2 + $0x40] sm:$0xff] %v395
    %404 = vst [vmem:[#allocation2 + $0x48] sm:$0xff] %v396
    %405 = vst [vmem:[#allocation2 + $0x50] sm:$0xff] %v397
    %406 = vst [vmem:[#allocation2 + $0x58] sm:$0xff] %v398
    %407 = vst [vmem:[#allocation2 + $0x60] sm:$0xff] %v399
    %408 = vst [vmem:[#allocation2 + $0x68] sm:$0xff] %v400
    %409 = vst [vmem:[#allocation2 + $0x70] sm:$0xff] %v401
    %410 = vst [vmem:[#allocation2 + $0x78] sm:$0xff] %v402
    %411 = vrot.lane.b32.xlu0 %v205, 124
    %v412 = vpop.permute.xlu0 %411
    %413 = vrot.lane.b32.xlu0 %v206, 124
    %v414 = vpop.permute.xlu0 %413
    %415 = vrot.lane.b32.xlu0 %v207, 124
    %v416 = vpop.permute.xlu0 %415
    %417 = vrot.lane.b32.xlu0 %v208, 124
    %v418 = vpop.permute.xlu0 %417
    %419 = vrot.lane.b32.xlu0 %v209, 124
    %v420 = vpop.permute.xlu0 %419
    %421 = vrot.lane.b32.xlu0 %v210, 124
    %v422 = vpop.permute.xlu0 %421
    %423 = vrot.lane.b32.xlu0 %v211, 124
    %v424 = vpop.permute.xlu0 %423
    %425 = vrot.lane.b32.xlu0 %v212, 124
    %v426 = vpop.permute.xlu0 %425
    %427 = vrot.lane.b32.xlu0 %v213, 124
    %v428 = vpop.permute.xlu0 %427
    %429 = vrot.lane.b32.xlu0 %v214, 124
    %v430 = vpop.permute.xlu0 %429
    %431 = vrot.lane.b32.xlu0 %v215, 124
    %v432 = vpop.permute.xlu0 %431
    %433 = vrot.lane.b32.xlu0 %v216, 124
    %v434 = vpop.permute.xlu0 %433
    %435 = vrot.lane.b32.xlu0 %v217, 124
    %v436 = vpop.permute.xlu0 %435
    %437 = vrot.lane.b32.xlu0 %v218, 124
    %v438 = vpop.permute.xlu0 %437
    %439 = vrot.lane.b32.xlu0 %v219, 124
    %v440 = vpop.permute.xlu0 %439
    %441 = vrot.lane.b32.xlu0 %v220, 124
    %v442 = vpop.permute.xlu0 %441
    %vm443 = vcmask 1014784
    %v444 = vsel %vm443, %v412, %v414
    %v445 = vsel %vm443, %v414, %v416
    %v446 = vsel %vm443, %v416, %v418
    %v447 = vsel %vm443, %v420, %v422
    %v448 = vsel %vm443, %v422, %v424
    %v449 = vsel %vm443, %v424, %v426
    %v450 = vsel %vm443, %v428, %v430
    %v451 = vsel %vm443, %v430, %v432
    %v452 = vsel %vm443, %v432, %v434
    %v453 = vsel %vm443, %v436, %v438
    %v454 = vsel %vm443, %v438, %v440
    %v455 = vsel %vm443, %v440, %v442
    %v476 = vsel %vm443, %v418, %v412
    %v477 = vsel %vm443, %v426, %v420
    %v478 = vsel %vm443, %v434, %v428
    %v479 = vsel %vm443, %v442, %v436
    %vm480 = vcmp.lt.s32.totalorder %v270, 252
    %vm481 = vcmp.lt.s32.totalorder %v271, 252
    %vm482 = vcmp.lt.s32.totalorder %v272, 252
    %vm483 = vcmp.lt.s32.totalorder %v273, 252
    %v484 = vsel %vm480, %v444, 0.0
    %v485 = vsel %vm481, %v445, 0.0
    %v486 = vsel %vm482, %v446, 0.0
    %v487 = vsel %vm483, %v476, 0.0
    %v488 = vsel %vm480, %v447, 0.0
    %v489 = vsel %vm481, %v448, 0.0
    %v490 = vsel %vm482, %v449, 0.0
    %v491 = vsel %vm483, %v477, 0.0
    %v492 = vsel %vm480, %v450, 0.0
    %v493 = vsel %vm481, %v451, 0.0
    %v494 = vsel %vm482, %v452, 0.0
    %v495 = vsel %vm483, %v478, 0.0
    %v496 = vsel %vm480, %v453, 0.0
    %v497 = vsel %vm481, %v454, 0.0
    %v498 = vsel %vm482, %v455, 0.0
    %v499 = vsel %vm483, %v479, 0.0
    %v500 = vpack.c.bf16 %v488, %v484
    %v501 = vpack.c.bf16 %v489, %v485
    %v502 = vpack.c.bf16 %v490, %v486
    %v503 = vpack.c.bf16 %v491, %v487
    %v504 = vpack.c.bf16 %v496, %v492
    %v505 = vpack.c.bf16 %v497, %v493
    %v506 = vpack.c.bf16 %v498, %v494
    %v507 = vpack.c.bf16 %v499, %v495
    %508 = vst [vmem:[#allocation2 + $0x80] sm:$0xff] %v500
    %509 = vst [vmem:[#allocation2 + $0x88] sm:$0xff] %v501
    %510 = vst [vmem:[#allocation2 + $0x90] sm:$0xff] %v502
    %511 = vst [vmem:[#allocation2 + $0x98] sm:$0xff] %v503
    %512 = vst [vmem:[#allocation2 + $0xa0] sm:$0xff] %v504
    %513 = vst [vmem:[#allocation2 + $0xa8] sm:$0xff] %v505
    %514 = vst [vmem:[#allocation2 + $0xb0] sm:$0xff] %v506
    %515 = vst [vmem:[#allocation2 + $0xb8] sm:$0xff] %v507
    %516 = vrot.lane.b32.xlu0 %v208, 1
    %v517 = vpop.permute.xlu0 %516
    %518 = vrot.lane.b32.xlu0 %v212, 1
    %v519 = vpop.permute.xlu0 %518
    %520 = vrot.lane.b32.xlu0 %v216, 1
    %v521 = vpop.permute.xlu0 %520
    %522 = vrot.lane.b32.xlu0 %v220, 1
    %v523 = vpop.permute.xlu0 %522
    %528 = vrot.lane.b32.xlu0 %v205, 1
    %v529 = vpop.permute.xlu0 %528
    %530 = vrot.lane.b32.xlu0 %v206, 1
    %v531 = vpop.permute.xlu0 %530
    %532 = vrot.lane.b32.xlu0 %v207, 1
    %v533 = vpop.permute.xlu0 %532
    %534 = vrot.lane.b32.xlu0 %v209, 1
    %v535 = vpop.permute.xlu0 %534
    %536 = vrot.lane.b32.xlu0 %v210, 1
    %v537 = vpop.permute.xlu0 %536
    %538 = vrot.lane.b32.xlu0 %v211, 1
    %v539 = vpop.permute.xlu0 %538
    %540 = vrot.lane.b32.xlu0 %v213, 1
    %v541 = vpop.permute.xlu0 %540
    %542 = vrot.lane.b32.xlu0 %v214, 1
    %v543 = vpop.permute.xlu0 %542
    %544 = vrot.lane.b32.xlu0 %v215, 1
    %v545 = vpop.permute.xlu0 %544
    %546 = vrot.lane.b32.xlu0 %v217, 1
    %v547 = vpop.permute.xlu0 %546
    %548 = vrot.lane.b32.xlu0 %v218, 1
    %v549 = vpop.permute.xlu0 %548
    %550 = vrot.lane.b32.xlu0 %v219, 1
    %v551 = vpop.permute.xlu0 %550
    %vm552 = vcmask 7168
    %v553 = vsel %vm552, %v529, %v531
    %v554 = vsel %vm552, %v531, %v533
    %v555 = vsel %vm552, %v533, %v517
    %v556 = vsel %vm552, %v535, %v537
    %v557 = vsel %vm552, %v537, %v539
    %v558 = vsel %vm552, %v539, %v519
    %v559 = vsel %vm552, %v541, %v543
    %v560 = vsel %vm552, %v543, %v545
    %v561 = vsel %vm552, %v545, %v521
    %v562 = vsel %vm552, %v547, %v549
    %v563 = vsel %vm552, %v549, %v551
    %v564 = vsel %vm552, %v551, %v523
    %v581 = vsel %vm552, %v517, %v529
    %v582 = vsel %vm552, %v519, %v535
    %v583 = vsel %vm552, %v521, %v541
    %v584 = vsel %vm552, %v523, %v547
    %vm585 = vcmp.ge.s32.totalorder %v270, 1
    %vm586 = vcmp.ge.s32.totalorder %v271, 1
    %vm587 = vcmp.ge.s32.totalorder %v272, 1
    %vm588 = vcmp.ge.s32.totalorder %v273, 1
    %v589 = vsel %vm585, %v581, 0.0
    %v590 = vsel %vm586, %v553, 0.0
    %v591 = vsel %vm587, %v554, 0.0
    %v592 = vsel %vm588, %v555, 0.0
    %v593 = vsel %vm585, %v582, 0.0
    %v594 = vsel %vm586, %v556, 0.0
    %v595 = vsel %vm587, %v557, 0.0
    %v596 = vsel %vm588, %v558, 0.0
    %v597 = vsel %vm585, %v583, 0.0
    %v598 = vsel %vm586, %v559, 0.0
    %v599 = vsel %vm587, %v560, 0.0
    %v600 = vsel %vm588, %v561, 0.0
    %v601 = vsel %vm585, %v584, 0.0
    %v602 = vsel %vm586, %v562, 0.0
    %v603 = vsel %vm587, %v563, 0.0
    %v604 = vsel %vm588, %v564, 0.0
    %v605 = vpack.c.bf16 %v593, %v589
    %v606 = vpack.c.bf16 %v594, %v590
    %v607 = vpack.c.bf16 %v595, %v591
    %v608 = vpack.c.bf16 %v596, %v592
    %v609 = vpack.c.bf16 %v601, %v597
    %v610 = vpack.c.bf16 %v602, %v598
    %v611 = vpack.c.bf16 %v603, %v599
    %v612 = vpack.c.bf16 %v604, %v600
    %613 = vst [vmem:[#allocation2 + $0xc0] sm:$0xff] %v605
    %614 = vst [vmem:[#allocation2 + $0xc8] sm:$0xff] %v606
    %615 = vst [vmem:[#allocation2 + $0xd0] sm:$0xff] %v607
    %616 = vst [vmem:[#allocation2 + $0xd8] sm:$0xff] %v608
    %617 = vst [vmem:[#allocation2 + $0xe0] sm:$0xff] %v609
    %618 = vst [vmem:[#allocation2 + $0xe8] sm:$0xff] %v610
    %619 = vst [vmem:[#allocation2 + $0xf0] sm:$0xff] %v611
    %620 = vst [vmem:[#allocation2 + $0xf8] sm:$0xff] %v612
    %621 = vrot.lane.b32.xlu0 %v205, 127
    %v622 = vpop.permute.xlu0 %621
    %623 = vrot.lane.b32.xlu0 %v206, 127
    %v624 = vpop.permute.xlu0 %623
    %625 = vrot.lane.b32.xlu0 %v207, 127
    %v626 = vpop.permute.xlu0 %625
    %627 = vrot.lane.b32.xlu0 %v208, 127
    %v628 = vpop.permute.xlu0 %627
    %629 = vrot.lane.b32.xlu0 %v209, 127
    %v630 = vpop.permute.xlu0 %629
    %631 = vrot.lane.b32.xlu0 %v210, 127
    %v632 = vpop.permute.xlu0 %631
    %633 = vrot.lane.b32.xlu0 %v211, 127
    %v634 = vpop.permute.xlu0 %633
    %635 = vrot.lane.b32.xlu0 %v212, 127
    %v636 = vpop.permute.xlu0 %635
    %637 = vrot.lane.b32.xlu0 %v213, 127
    %v638 = vpop.permute.xlu0 %637
    %639 = vrot.lane.b32.xlu0 %v214, 127
    %v640 = vpop.permute.xlu0 %639
    %641 = vrot.lane.b32.xlu0 %v215, 127
    %v642 = vpop.permute.xlu0 %641
    %643 = vrot.lane.b32.xlu0 %v216, 127
    %v644 = vpop.permute.xlu0 %643
    %645 = vrot.lane.b32.xlu0 %v217, 127
    %v646 = vpop.permute.xlu0 %645
    %647 = vrot.lane.b32.xlu0 %v218, 127
    %v648 = vpop.permute.xlu0 %647
    %649 = vrot.lane.b32.xlu0 %v219, 127
    %v650 = vpop.permute.xlu0 %649
    %651 = vrot.lane.b32.xlu0 %v220, 127
    %v652 = vpop.permute.xlu0 %651
    %vm653 = vcmask 1039360
    %v654 = vsel %vm653, %v622, %v624
    %v655 = vsel %vm653, %v624, %v626
    %v656 = vsel %vm653, %v626, %v628
    %v657 = vsel %vm653, %v630, %v632
    %v658 = vsel %vm653, %v632, %v634
    %v659 = vsel %vm653, %v634, %v636
    %v660 = vsel %vm653, %v638, %v640
    %v661 = vsel %vm653, %v640, %v642
    %v662 = vsel %vm653, %v642, %v644
    %v663 = vsel %vm653, %v646, %v648
    %v664 = vsel %vm653, %v648, %v650
    %v665 = vsel %vm653, %v650, %v652
    %v686 = vsel %vm653, %v628, %v622
    %v687 = vsel %vm653, %v636, %v630
    %v688 = vsel %vm653, %v644, %v638
    %v689 = vsel %vm653, %v652, %v646
    %vm690 = vcmp.lt.s32.totalorder %v270, 255
    %vm691 = vcmp.lt.s32.totalorder %v271, 255
    %vm692 = vcmp.lt.s32.totalorder %v272, 255
    %vm693 = vcmp.lt.s32.totalorder %v273, 255
    %v694 = vsel %vm690, %v654, 0.0
    %v695 = vsel %vm691, %v655, 0.0
    %v696 = vsel %vm692, %v656, 0.0
    %v697 = vsel %vm693, %v686, 0.0
    %v698 = vsel %vm690, %v657, 0.0
    %v699 = vsel %vm691, %v658, 0.0
    %v700 = vsel %vm692, %v659, 0.0
    %v701 = vsel %vm693, %v687, 0.0
    %v702 = vsel %vm690, %v660, 0.0
    %v703 = vsel %vm691, %v661, 0.0
    %v704 = vsel %vm692, %v662, 0.0
    %v705 = vsel %vm693, %v688, 0.0
    %v706 = vsel %vm690, %v663, 0.0
    %v707 = vsel %vm691, %v664, 0.0
    %v708 = vsel %vm692, %v665, 0.0
    %v709 = vsel %vm693, %v689, 0.0
    %v710 = vpack.c.bf16 %v698, %v694
    %v711 = vpack.c.bf16 %v699, %v695
    %v712 = vpack.c.bf16 %v700, %v696
    %v713 = vpack.c.bf16 %v701, %v697
    %v714 = vpack.c.bf16 %v706, %v702
    %v715 = vpack.c.bf16 %v707, %v703
    %v716 = vpack.c.bf16 %v708, %v704
    %v717 = vpack.c.bf16 %v709, %v705
    %718 = vst [vmem:[#allocation2 + $0x100] sm:$0xff] %v710
    %719 = vst [vmem:[#allocation2 + $0x108] sm:$0xff] %v711
    %720 = vst [vmem:[#allocation2 + $0x110] sm:$0xff] %v712
    %721 = vst [vmem:[#allocation2 + $0x118] sm:$0xff] %v713
    %722 = vst [vmem:[#allocation2 + $0x120] sm:$0xff] %v714
    %723 = vst [vmem:[#allocation2 + $0x128] sm:$0xff] %v715
    %724 = vst [vmem:[#allocation2 + $0x130] sm:$0xff] %v716
    %725 = vst [vmem:[#allocation2 + $0x138] sm:$0xff] %v717
    %v726 = vld [vmem:[%s3] sm:$0xff]
    %v727 = vld [vmem:[%s3 + $0x8] sm:$0xff]
    %v728 = vld [vmem:[%s3 + $0x10] sm:$0xff]
    %v729 = vld [vmem:[%s3 + $0x18] sm:$0xff]
    %v730 = vld [vmem:[#allocation2] sm:$0xff]
    %v731 = vld [vmem:[#allocation2 + $0x8] sm:$0xff]
    %v732 = vld [vmem:[#allocation2 + $0x10] sm:$0xff]
    %v733 = vld [vmem:[#allocation2 + $0x18] sm:$0xff]
    %v734 = vld [vmem:[#allocation2 + $0x20] sm:$0xff]
    %v735 = vld [vmem:[#allocation2 + $0x28] sm:$0xff]
    %v736 = vld [vmem:[#allocation2 + $0x30] sm:$0xff]
    %v737 = vld [vmem:[#allocation2 + $0x38] sm:$0xff]
    %v738 = vld [vmem:[#allocation2 + $0x40] sm:$0xff]
    %v739 = vld [vmem:[#allocation2 + $0x48] sm:$0xff]
    %v740 = vld [vmem:[#allocation2 + $0x50] sm:$0xff]
    %v741 = vld [vmem:[#allocation2 + $0x58] sm:$0xff]
    %v742 = vld [vmem:[#allocation2 + $0x60] sm:$0xff]
    %v743 = vld [vmem:[#allocation2 + $0x68] sm:$0xff]
    %v744 = vld [vmem:[#allocation2 + $0x70] sm:$0xff]
    %v745 = vld [vmem:[#allocation2 + $0x78] sm:$0xff]
    %v746 = vld [vmem:[#allocation2 + $0x80] sm:$0xff]
    %v747 = vld [vmem:[#allocation2 + $0x88] sm:$0xff]
    %v748 = vld [vmem:[#allocation2 + $0x90] sm:$0xff]
    %v749 = vld [vmem:[#allocation2 + $0x98] sm:$0xff]
    %v750 = vld [vmem:[#allocation2 + $0xa0] sm:$0xff]
    %v751 = vld [vmem:[#allocation2 + $0xa8] sm:$0xff]
    %v752 = vld [vmem:[#allocation2 + $0xb0] sm:$0xff]
    %v753 = vld [vmem:[#allocation2 + $0xb8] sm:$0xff]
    %v754 = vld [vmem:[#allocation2 + $0xc0] sm:$0xff]
    %v755 = vld [vmem:[#allocation2 + $0xc8] sm:$0xff]
    %v756 = vld [vmem:[#allocation2 + $0xd0] sm:$0xff]
    %v757 = vld [vmem:[#allocation2 + $0xd8] sm:$0xff]
    %v758 = vld [vmem:[#allocation2 + $0xe0] sm:$0xff]
    %v759 = vld [vmem:[#allocation2 + $0xe8] sm:$0xff]
    %v760 = vld [vmem:[#allocation2 + $0xf0] sm:$0xff]
    %v761 = vld [vmem:[#allocation2 + $0xf8] sm:$0xff]
    %v762 = vld [vmem:[#allocation2 + $0x100] sm:$0xff]
    %v763 = vld [vmem:[#allocation2 + $0x108] sm:$0xff]
    %v764 = vld [vmem:[#allocation2 + $0x110] sm:$0xff]
    %v765 = vld [vmem:[#allocation2 + $0x118] sm:$0xff]
    %v766 = vld [vmem:[#allocation2 + $0x120] sm:$0xff]
    %v767 = vld [vmem:[#allocation2 + $0x128] sm:$0xff]
    %v768 = vld [vmem:[#allocation2 + $0x130] sm:$0xff]
    %v769 = vld [vmem:[#allocation2 + $0x138] sm:$0xff]
    %v770 = vld [vmem:[%s4] sm:$0xff]
    %v771 = vld [vmem:[%s4 + $0x8] sm:$0xff]
    %v772 = vld [vmem:[%s4 + $0x10] sm:$0xff]
    %v773 = vld [vmem:[%s4 + $0x18] sm:$0xff]
    %775 = vset.pattern.permute.xlu0 0
    %776 = vperm.xlu0 %775, %v770
    %v777 = vpop.permute.xlu0 %776
    %780 = vset.pattern.permute.xlu0 0
    %781 = vperm.xlu0 %780, %v771
    %v782 = vpop.permute.xlu0 %781
    %785 = vset.pattern.permute.xlu0 0
    %786 = vperm.xlu0 %785, %v772
    %v787 = vpop.permute.xlu0 %786
    %790 = vset.pattern.permute.xlu0 0
    %791 = vperm.xlu0 %790, %v773
    %v792 = vpop.permute.xlu0 %791
    %v798 = vunpack.c.l.b16 %v726
    %v799 = vunpack.c.h.b16 %v726
    %v800 = vunpack.c.l.b16 %v727
    %v801 = vunpack.c.h.b16 %v727
    %v802 = vunpack.c.l.b16 %v728
    %v803 = vunpack.c.h.b16 %v728
    %v804 = vunpack.c.l.b16 %v729
    %v805 = vunpack.c.h.b16 %v729
    %v806 = vpack.c.b16 %v800, %v798
    %v807 = vpack.c.b16 %v801, %v799
    %v808 = vpack.c.b16 %v804, %v802
    %v809 = vpack.c.b16 %v805, %v803
    %vm812 = vcmask 261120
    %v814 = vsel %vm812, %v807, 0
    %v817 = vsel %vm812, %v809, 0
    %819 = vmatprep.subr.bf16.mxu0 %v731
    %820 = vmatpush1.bf16.msra.mxu0 %v730
    %821 = vmatprep.subr.bf16.mxu0 %v735
    %822 = vmatpush1.bf16.msra.mxu0 %v734
    %823 = vmatprep.subr.bf16.mxu0 %v739
    %824 = vmatpush1.bf16.msra.mxu0 %v738
    %825 = vmatprep.subr.bf16.mxu0 %v743
    %826 = vmatpush1.bf16.msra.mxu0 %v742
    %827 = vmatprep.subr.bf16.mxu0 %v747
    %828 = vmatpush1.bf16.msra.mxu0 %v746
    %829 = vmatprep.subr.bf16.mxu0 %v751
    %830 = vmatpush1.bf16.msra.mxu0 %v750
    %831 = vmatprep.subr.bf16.mxu0 %v755
    %832 = vmatpush1.bf16.msra.mxu0 %v754
    %833 = vmatprep.subr.bf16.mxu0 %v759
    %834 = vmatpush1.bf16.msra.mxu0 %v758
    %835 = vmatprep.subr.bf16.mxu0 %v763
    %836 = vmatpush1.bf16.msra.mxu0 %v762
    %837 = vmatprep.subr.bf16.mxu0 %v767
    %838 = vmatpush1.bf16.msra.mxu0 %v766
    %839 = vmatprep.subr.bf16.mxu0 0
    %840 = vmatpush1.bf16.msra.mxu0 0
    %841 = vmatprep.subr.bf16.mxu0 0
    %842 = vmatpush1.bf16.msra.mxu0 0
    %843 = vmatprep.subr.bf16.mxu0 0
    %844 = vmatpush1.bf16.msra.mxu0 0
    %845 = vmatprep.subr.bf16.mxu0 0
    %846 = vmatpush1.bf16.msra.mxu0 0
    %847 = vmatprep.subr.bf16.mxu0 0
    %848 = vmatpush1.bf16.msra.mxu0 0
    %849 = vmatprep.subr.bf16.mxu0 0
    %850 = vmatpush1.bf16.msra.mxu0 0
    %851 = vmatprep.mubr.bf16.mxu0 %v814
    %852 = vmatmul.mubr.bf16.gmra.mrb[0].mxu0 %v806
    %v853 = vpop.f32.mrb[0].mxu0
    %v854 = vadd.f32 %v777, %v853
    %v855 = vpop.f32.mrb[0].mxu0
    %v856 = vadd.f32 %v777, %v855
    %v857 = vpop.f32.mrb[0].mxu0
    %v858 = vadd.f32 %v782, %v857
    %v859 = vpop.f32.mrb[0].mxu0
    %v860 = vadd.f32 %v782, %v859
    %861 = vmatprep.mubr.bf16.mxu0 %v817
    %862 = vmatmul.mubr.bf16.gmra.mrb[0].mxu0 %v808
    %v863 = vpop.f32.mrb[0].mxu0
    %v864 = vadd.f32 %v787, %v863
    %v865 = vpop.f32.mrb[0].mxu0
    %v866 = vadd.f32 %v787, %v865
    %v867 = vpop.f32.mrb[0].mxu0
    %v868 = vadd.f32 %v792, %v867
    %v869 = vpop.f32.mrb[0].mxu0
    %v870 = vadd.f32 %v792, %v869
    %871 = vdwg.mxu0
    %872 = vmatprep.subr.bf16.mxu0 %v733
    %873 = vmatpush1.bf16.msra.mxu0 %v732
    %874 = vmatprep.subr.bf16.mxu0 %v737
    %875 = vmatpush1.bf16.msra.mxu0 %v736
    %876 = vmatprep.subr.bf16.mxu0 %v741
    %877 = vmatpush1.bf16.msra.mxu0 %v740
    %878 = vmatprep.subr.bf16.mxu0 %v745
    %879 = vmatpush1.bf16.msra.mxu0 %v744
    %880 = vmatprep.subr.bf16.mxu0 %v749
    %881 = vmatpush1.bf16.msra.mxu0 %v748
    %882 = vmatprep.subr.bf16.mxu0 %v753
    %883 = vmatpush1.bf16.msra.mxu0 %v752
    %884 = vmatprep.subr.bf16.mxu0 %v757
    %885 = vmatpush1.bf16.msra.mxu0 %v756
    %886 = vmatprep.subr.bf16.mxu0 %v761
    %887 = vmatpush1.bf16.msra.mxu0 %v760
    %888 = vmatprep.subr.bf16.mxu0 %v765
    %889 = vmatpush1.bf16.msra.mxu0 %v764
    %890 = vmatprep.subr.bf16.mxu0 %v769
    %891 = vmatpush1.bf16.msra.mxu0 %v768
    %892 = vmatprep.subr.bf16.mxu0 0
    %893 = vmatpush1.bf16.msra.mxu0 0
    %894 = vmatprep.subr.bf16.mxu0 0
    %895 = vmatpush1.bf16.msra.mxu0 0
    %896 = vmatprep.subr.bf16.mxu0 0
    %897 = vmatpush1.bf16.msra.mxu0 0
    %898 = vmatprep.subr.bf16.mxu0 0
    %899 = vmatpush1.bf16.msra.mxu0 0
    %900 = vmatprep.subr.bf16.mxu0 0
    %901 = vmatpush1.bf16.msra.mxu0 0
    %902 = vmatprep.subr.bf16.mxu0 0
    %903 = vmatpush1.bf16.msra.mxu0 0
    %904 = vmatprep.mubr.bf16.mxu0 %v814
    %905 = vmatmul.mubr.bf16.gmra.mrb[0].mxu0 %v806
    %v906 = vpop.f32.mrb[0].mxu0
    %v907 = vadd.f32 %v777, %v906
    %v908 = vpop.f32.mrb[0].mxu0
    %v909 = vadd.f32 %v777, %v908
    %v910 = vpop.f32.mrb[0].mxu0
    %v911 = vadd.f32 %v782, %v910
    %v912 = vpop.f32.mrb[0].mxu0
    %v913 = vadd.f32 %v782, %v912
    %914 = vmatprep.mubr.bf16.mxu0 %v817
    %915 = vmatmul.mubr.bf16.gmra.mrb[0].mxu0 %v808
    %v916 = vpop.f32.mrb[0].mxu0
    %v917 = vadd.f32 %v787, %v916
    %v918 = vpop.f32.mrb[0].mxu0
    %v919 = vadd.f32 %v787, %v918
    %v920 = vpop.f32.mrb[0].mxu0
    %v921 = vadd.f32 %v792, %v920
    %v922 = vpop.f32.mrb[0].mxu0
    %v923 = vadd.f32 %v792, %v922
    %924 = vdwg.mxu0
    %v925 = vmax.f32 %v854, 0.0
    %v926 = vmax.f32 %v856, 0.0
    %v927 = vmax.f32 %v907, 0.0
    %v928 = vmax.f32 %v909, 0.0
    %v929 = vmax.f32 %v858, 0.0
    %v930 = vmax.f32 %v860, 0.0
    %v931 = vmax.f32 %v911, 0.0
    %v932 = vmax.f32 %v913, 0.0
    %v933 = vmax.f32 %v864, 0.0
    %v934 = vmax.f32 %v866, 0.0
    %v935 = vmax.f32 %v917, 0.0
    %v936 = vmax.f32 %v919, 0.0
    %v937 = vmax.f32 %v868, 0.0
    %v938 = vmax.f32 %v870, 0.0
    %v939 = vmax.f32 %v921, 0.0
    %v940 = vmax.f32 %v923, 0.0
    %v941 = vadd.f32 %v925, %v205
    %v942 = vadd.f32 %v926, %v206
    %v943 = vadd.f32 %v927, %v207
    %v944 = vadd.f32 %v928, %v208
    %v945 = vadd.f32 %v929, %v209
    %v946 = vadd.f32 %v930, %v210
    %v947 = vadd.f32 %v931, %v211
    %v948 = vadd.f32 %v932, %v212
    %v949 = vadd.f32 %v933, %v213
    %v950 = vadd.f32 %v934, %v214
    %v951 = vadd.f32 %v935, %v215
    %v952 = vadd.f32 %v936, %v216
    %v953 = vadd.f32 %v937, %v217
    %v954 = vadd.f32 %v938, %v218
    %v955 = vadd.f32 %v939, %v219
    %v956 = vadd.f32 %v940, %v220
    %v957 = vpack.c.bf16 %v945, %v941
    %v958 = vpack.c.bf16 %v946, %v942
    %v959 = vpack.c.bf16 %v947, %v943
    %v960 = vpack.c.bf16 %v948, %v944
    %v961 = vpack.c.bf16 %v953, %v949
    %v962 = vpack.c.bf16 %v954, %v950
    %v963 = vpack.c.bf16 %v955, %v951
    %v964 = vpack.c.bf16 %v956, %v952
    %965 = vst [vmem:[#allocation2] sm:$0xff] %v957
    %966 = vst [vmem:[#allocation2 + $0x8] sm:$0xff] %v958
    %967 = vst [vmem:[#allocation2 + $0x10] sm:$0xff] %v959
    %968 = vst [vmem:[#allocation2 + $0x18] sm:$0xff] %v960
    %969 = vst [vmem:[#allocation2 + $0x20] sm:$0xff] %v961
    %970 = vst [vmem:[#allocation2 + $0x28] sm:$0xff] %v962
    %971 = vst [vmem:[#allocation2 + $0x30] sm:$0xff] %v963
    %972 = vst [vmem:[#allocation2 + $0x38] sm:$0xff] %v964
    %977 = vrot.lane.b32.xlu0 %v944, 2
    %v978 = vpop.permute.xlu0 %977
    %979 = vrot.lane.b32.xlu0 %v948, 2
    %v980 = vpop.permute.xlu0 %979
    %981 = vrot.lane.b32.xlu0 %v952, 2
    %v982 = vpop.permute.xlu0 %981
    %983 = vrot.lane.b32.xlu0 %v956, 2
    %v984 = vpop.permute.xlu0 %983
    %1001 = vrot.lane.b32.xlu0 %v941, 2
    %v1002 = vpop.permute.xlu0 %1001
    %1003 = vrot.lane.b32.xlu0 %v942, 2
    %v1004 = vpop.permute.xlu0 %1003
    %1005 = vrot.lane.b32.xlu0 %v943, 2
    %v1006 = vpop.permute.xlu0 %1005
    %1007 = vrot.lane.b32.xlu0 %v945, 2
    %v1008 = vpop.permute.xlu0 %1007
    %1009 = vrot.lane.b32.xlu0 %v946, 2
    %v1010 = vpop.permute.xlu0 %1009
    %1011 = vrot.lane.b32.xlu0 %v947, 2
    %v1012 = vpop.permute.xlu0 %1011
    %1013 = vrot.lane.b32.xlu0 %v949, 2
    %v1014 = vpop.permute.xlu0 %1013
    %1015 = vrot.lane.b32.xlu0 %v950, 2
    %v1016 = vpop.permute.xlu0 %1015
    %1017 = vrot.lane.b32.xlu0 %v951, 2
    %v1018 = vpop.permute.xlu0 %1017
    %1019 = vrot.lane.b32.xlu0 %v953, 2
    %v1020 = vpop.permute.xlu0 %1019
    %1021 = vrot.lane.b32.xlu0 %v954, 2
    %v1022 = vpop.permute.xlu0 %1021
    %1023 = vrot.lane.b32.xlu0 %v955, 2
    %v1024 = vpop.permute.xlu0 %1023
    %vm1025 = vcmask 15360
    %v1026 = vsel %vm1025, %v1002, %v1004
    %v1027 = vsel %vm1025, %v1004, %v1006
    %v1028 = vsel %vm1025, %v1006, %v978
    %v1029 = vsel %vm1025, %v1008, %v1010
    %v1030 = vsel %vm1025, %v1010, %v1012
    %v1031 = vsel %vm1025, %v1012, %v980
    %v1032 = vsel %vm1025, %v1014, %v1016
    %v1033 = vsel %vm1025, %v1016, %v1018
    %v1034 = vsel %vm1025, %v1018, %v982
    %v1035 = vsel %vm1025, %v1020, %v1022
    %v1036 = vsel %vm1025, %v1022, %v1024
    %v1037 = vsel %vm1025, %v1024, %v984
    %v1054 = vsel %vm1025, %v978, %v1002
    %v1055 = vsel %vm1025, %v980, %v1008
    %v1056 = vsel %vm1025, %v982, %v1014
    %v1057 = vsel %vm1025, %v984, %v1020
    %vm1058 = vcmp.ge.s32.totalorder %v270, 2
    %vm1059 = vcmp.ge.s32.totalorder %v271, 2
    %vm1060 = vcmp.ge.s32.totalorder %v272, 2
    %vm1061 = vcmp.ge.s32.totalorder %v273, 2
    %v1062 = vsel %vm1058, %v1054, 0.0
    %v1063 = vsel %vm1059, %v1026, 0.0
    %v1064 = vsel %vm1060, %v1027, 0.0
    %v1065 = vsel %vm1061, %v1028, 0.0
    %v1066 = vsel %vm1058, %v1055, 0.0
    %v1067 = vsel %vm1059, %v1029, 0.0
    %v1068 = vsel %vm1060, %v1030, 0.0
    %v1069 = vsel %vm1061, %v1031, 0.0
    %v1070 = vsel %vm1058, %v1056, 0.0
    %v1071 = vsel %vm1059, %v1032, 0.0
    %v1072 = vsel %vm1060, %v1033, 0.0
    %v1073 = vsel %vm1061, %v1034, 0.0
    %v1074 = vsel %vm1058, %v1057, 0.0
    %v1075 = vsel %vm1059, %v1035, 0.0
    %v1076 = vsel %vm1060, %v1036, 0.0
    %v1077 = vsel %vm1061, %v1037, 0.0
    %v1078 = vpack.c.bf16 %v1066, %v1062
    %v1079 = vpack.c.bf16 %v1067, %v1063
    %v1080 = vpack.c.bf16 %v1068, %v1064
    %v1081 = vpack.c.bf16 %v1069, %v1065
    %v1082 = vpack.c.bf16 %v1074, %v1070
    %v1083 = vpack.c.bf16 %v1075, %v1071
    %v1084 = vpack.c.bf16 %v1076, %v1072
    %v1085 = vpack.c.bf16 %v1077, %v1073
    %1086 = vst [vmem:[#allocation2 + $0x40] sm:$0xff] %v1078
    %1087 = vst [vmem:[#allocation2 + $0x48] sm:$0xff] %v1079
    %1088 = vst [vmem:[#allocation2 + $0x50] sm:$0xff] %v1080
    %1089 = vst [vmem:[#allocation2 + $0x58] sm:$0xff] %v1081
    %1090 = vst [vmem:[#allocation2 + $0x60] sm:$0xff] %v1082
    %1091 = vst [vmem:[#allocation2 + $0x68] sm:$0xff] %v1083
    %1092 = vst [vmem:[#allocation2 + $0x70] sm:$0xff] %v1084
    %1093 = vst [vmem:[#allocation2 + $0x78] sm:$0xff] %v1085
    %1094 = vrot.lane.b32.xlu0 %v941, 126
    %v1095 = vpop.permute.xlu0 %1094
    %1096 = vrot.lane.b32.xlu0 %v942, 126
    %v1097 = vpop.permute.xlu0 %1096
    %1098 = vrot.lane.b32.xlu0 %v943, 126
    %v1099 = vpop.permute.xlu0 %1098
    %1100 = vrot.lane.b32.xlu0 %v944, 126
    %v1101 = vpop.permute.xlu0 %1100
    %1102 = vrot.lane.b32.xlu0 %v945, 126
    %v1103 = vpop.permute.xlu0 %1102
    %1104 = vrot.lane.b32.xlu0 %v946, 126
    %v1105 = vpop.permute.xlu0 %1104
    %1106 = vrot.lane.b32.xlu0 %v947, 126
    %v1107 = vpop.permute.xlu0 %1106
    %1108 = vrot.lane.b32.xlu0 %v948, 126
    %v1109 = vpop.permute.xlu0 %1108
    %1110 = vrot.lane.b32.xlu0 %v949, 126
    %v1111 = vpop.permute.xlu0 %1110
    %1112 = vrot.lane.b32.xlu0 %v950, 126
    %v1113 = vpop.permute.xlu0 %1112
    %1114 = vrot.lane.b32.xlu0 %v951, 126
    %v1115 = vpop.permute.xlu0 %1114
    %1116 = vrot.lane.b32.xlu0 %v952, 126
    %v1117 = vpop.permute.xlu0 %1116
    %1118 = vrot.lane.b32.xlu0 %v953, 126
    %v1119 = vpop.permute.xlu0 %1118
    %1120 = vrot.lane.b32.xlu0 %v954, 126
    %v1121 = vpop.permute.xlu0 %1120
    %1122 = vrot.lane.b32.xlu0 %v955, 126
    %v1123 = vpop.permute.xlu0 %1122
    %1124 = vrot.lane.b32.xlu0 %v956, 126
    %v1125 = vpop.permute.xlu0 %1124
    %vm1126 = vcmask 1031168
    %v1127 = vsel %vm1126, %v1095, %v1097
    %v1128 = vsel %vm1126, %v1097, %v1099
    %v1129 = vsel %vm1126, %v1099, %v1101
    %v1130 = vsel %vm1126, %v1103, %v1105
    %v1131 = vsel %vm1126, %v1105, %v1107
    %v1132 = vsel %vm1126, %v1107, %v1109
    %v1133 = vsel %vm1126, %v1111, %v1113
    %v1134 = vsel %vm1126, %v1113, %v1115
    %v1135 = vsel %vm1126, %v1115, %v1117
    %v1136 = vsel %vm1126, %v1119, %v1121
    %v1137 = vsel %vm1126, %v1121, %v1123
    %v1138 = vsel %vm1126, %v1123, %v1125
    %v1159 = vsel %vm1126, %v1101, %v1095
    %v1160 = vsel %vm1126, %v1109, %v1103
    %v1161 = vsel %vm1126, %v1117, %v1111
    %v1162 = vsel %vm1126, %v1125, %v1119
    %vm1163 = vcmp.lt.s32.totalorder %v270, 254
    %vm1164 = vcmp.lt.s32.totalorder %v271, 254
    %vm1165 = vcmp.lt.s32.totalorder %v272, 254
    %vm1166 = vcmp.lt.s32.totalorder %v273, 254
    %v1167 = vsel %vm1163, %v1127, 0.0
    %v1168 = vsel %vm1164, %v1128, 0.0
    %v1169 = vsel %vm1165, %v1129, 0.0
    %v1170 = vsel %vm1166, %v1159, 0.0
    %v1171 = vsel %vm1163, %v1130, 0.0
    %v1172 = vsel %vm1164, %v1131, 0.0
    %v1173 = vsel %vm1165, %v1132, 0.0
    %v1174 = vsel %vm1166, %v1160, 0.0
    %v1175 = vsel %vm1163, %v1133, 0.0
    %v1176 = vsel %vm1164, %v1134, 0.0
    %v1177 = vsel %vm1165, %v1135, 0.0
    %v1178 = vsel %vm1166, %v1161, 0.0
    %v1179 = vsel %vm1163, %v1136, 0.0
    %v1180 = vsel %vm1164, %v1137, 0.0
    %v1181 = vsel %vm1165, %v1138, 0.0
    %v1182 = vsel %vm1166, %v1162, 0.0
    %v1183 = vpack.c.bf16 %v1171, %v1167
    %v1184 = vpack.c.bf16 %v1172, %v1168
    %v1185 = vpack.c.bf16 %v1173, %v1169
    %v1186 = vpack.c.bf16 %v1174, %v1170
    %v1187 = vpack.c.bf16 %v1179, %v1175
    %v1188 = vpack.c.bf16 %v1180, %v1176
    %v1189 = vpack.c.bf16 %v1181, %v1177
    %v1190 = vpack.c.bf16 %v1182, %v1178
    %1191 = vst [vmem:[#allocation2 + $0x80] sm:$0xff] %v1183
    %1192 = vst [vmem:[#allocation2 + $0x88] sm:$0xff] %v1184
    %1193 = vst [vmem:[#allocation2 + $0x90] sm:$0xff] %v1185
    %1194 = vst [vmem:[#allocation2 + $0x98] sm:$0xff] %v1186
    %1195 = vst [vmem:[#allocation2 + $0xa0] sm:$0xff] %v1187
    %1196 = vst [vmem:[#allocation2 + $0xa8] sm:$0xff] %v1188
    %1197 = vst [vmem:[#allocation2 + $0xb0] sm:$0xff] %v1189
    %1198 = vst [vmem:[#allocation2 + $0xb8] sm:$0xff] %v1190
    %s1199 = scalar_lea.vmem %s3, 32
    %v1200 = vld [vmem:[%s1199] sm:$0xff]
    %v1201 = vld [vmem:[%s1199 + $0x8] sm:$0xff]
    %v1202 = vld [vmem:[%s1199 + $0x10] sm:$0xff]
    %v1203 = vld [vmem:[%s1199 + $0x18] sm:$0xff]
    %v1204 = vld [vmem:[#allocation2] sm:$0xff]
    %v1205 = vld [vmem:[#allocation2 + $0x8] sm:$0xff]
    %v1206 = vld [vmem:[#allocation2 + $0x10] sm:$0xff]
    %v1207 = vld [vmem:[#allocation2 + $0x18] sm:$0xff]
    %v1208 = vld [vmem:[#allocation2 + $0x20] sm:$0xff]
    %v1209 = vld [vmem:[#allocation2 + $0x28] sm:$0xff]
    %v1210 = vld [vmem:[#allocation2 + $0x30] sm:$0xff]
    %v1211 = vld [vmem:[#allocation2 + $0x38] sm:$0xff]
    %v1212 = vld [vmem:[#allocation2 + $0x40] sm:$0xff]
    %v1213 = vld [vmem:[#allocation2 + $0x48] sm:$0xff]
    %v1214 = vld [vmem:[#allocation2 + $0x50] sm:$0xff]
    %v1215 = vld [vmem:[#allocation2 + $0x58] sm:$0xff]
    %v1216 = vld [vmem:[#allocation2 + $0x60] sm:$0xff]
    %v1217 = vld [vmem:[#allocation2 + $0x68] sm:$0xff]
    %v1218 = vld [vmem:[#allocation2 + $0x70] sm:$0xff]
    %v1219 = vld [vmem:[#allocation2 + $0x78] sm:$0xff]
    %v1220 = vld [vmem:[#allocation2 + $0x80] sm:$0xff]
    %v1221 = vld [vmem:[#allocation2 + $0x88] sm:$0xff]
    %v1222 = vld [vmem:[#allocation2 + $0x90] sm:$0xff]
    %v1223 = vld [vmem:[#allocation2 + $0x98] sm:$0xff]
    %v1224 = vld [vmem:[#allocation2 + $0xa0] sm:$0xff]
    %v1225 = vld [vmem:[#allocation2 + $0xa8] sm:$0xff]
    %v1226 = vld [vmem:[#allocation2 + $0xb0] sm:$0xff]
    %v1227 = vld [vmem:[#allocation2 + $0xb8] sm:$0xff]
    %s1228 = scalar_lea.vmem %s4, 32
    %v1229 = vld [vmem:[%s1228] sm:$0xff]
    %v1230 = vld [vmem:[%s1228 + $0x8] sm:$0xff]
    %v1231 = vld [vmem:[%s1228 + $0x10] sm:$0xff]
    %v1232 = vld [vmem:[%s1228 + $0x18] sm:$0xff]
    %1234 = vset.pattern.permute.xlu0 0
    %1235 = vperm.xlu0 %1234, %v1229
    %v1236 = vpop.permute.xlu0 %1235
    %1239 = vset.pattern.permute.xlu0 0
    %1240 = vperm.xlu0 %1239, %v1230
    %v1241 = vpop.permute.xlu0 %1240
    %1244 = vset.pattern.permute.xlu0 0
    %1245 = vperm.xlu0 %1244, %v1231
    %v1246 = vpop.permute.xlu0 %1245
    %1249 = vset.pattern.permute.xlu0 0
    %1250 = vperm.xlu0 %1249, %v1232
    %v1251 = vpop.permute.xlu0 %1250
    %v1257 = vunpack.c.l.b16 %v1200
    %v1258 = vunpack.c.l.b16 %v1201
    %v1259 = vunpack.c.l.b16 %v1202
    %v1260 = vunpack.c.l.b16 %v1203
    %v1261 = vpack.c.b16 %v1258, %v1257
    %v1262 = vpack.c.b16 %v1260, %v1259
    %vm1263 = vcmask 785408
    %v1265 = vsel %vm1263, %v1261, 0
    %v1268 = vsel %vm1263, %v1262, 0
    %1270 = vmatprep.subr.bf16.mxu0 %v1205
    %1271 = vmatpush1.bf16.msra.mxu0 %v1204
    %1272 = vmatprep.subr.bf16.mxu0 %v1209
    %1273 = vmatpush1.bf16.msra.mxu0 %v1208
    %1274 = vmatprep.subr.bf16.mxu0 %v1213
    %1275 = vmatpush1.bf16.msra.mxu0 %v1212
    %1276 = vmatprep.subr.bf16.mxu0 %v1217
    %1277 = vmatpush1.bf16.msra.mxu0 %v1216
    %1278 = vmatprep.subr.bf16.mxu0 %v1221
    %1279 = vmatpush1.bf16.msra.mxu0 %v1220
    %1280 = vmatprep.subr.bf16.mxu0 %v1225
    %1281 = vmatpush1.bf16.msra.mxu0 %v1224
    %1282 = vmatprep.subr.bf16.mxu0 0
    %1283 = vmatpush1.bf16.msra.mxu0 0
    %1284 = vmatprep.subr.bf16.mxu0 0
    %1285 = vmatpush1.bf16.msra.mxu0 0
    %1286 = vmatprep.subr.bf16.mxu0 0
    %1287 = vmatpush1.bf16.msra.mxu0 0
    %1288 = vmatprep.subr.bf16.mxu0 0
    %1289 = vmatpush1.bf16.msra.mxu0 0
    %1290 = vmatprep.subr.bf16.mxu0 0
    %1291 = vmatpush1.bf16.msra.mxu0 0
    %1292 = vmatprep.subr.bf16.mxu0 0
    %1293 = vmatpush1.bf16.msra.mxu0 0
    %1294 = vmatprep.subr.bf16.mxu0 0
    %1295 = vmatpush1.bf16.msra.mxu0 0
    %1296 = vmatprep.subr.bf16.mxu0 0
    %1297 = vmatpush1.bf16.msra.mxu0 0
    %1298 = vmatprep.subr.bf16.mxu0 0
    %1299 = vmatpush1.bf16.msra.mxu0 0
    %1300 = vmatprep.subr.bf16.mxu0 0
    %1301 = vmatpush1.bf16.msra.mxu0 0
    %1302 = vmatprep.mubr.bf16.mxu0 0
    %1303 = vmatmul.mubr.bf16.gmra.mrb[0].mxu0 %v1265
    %v1304 = vpop.f32.mrb[0].mxu0
    %v1305 = vadd.f32 %v1236, %v1304
    %v1306 = vpop.f32.mrb[0].mxu0
    %v1307 = vadd.f32 %v1236, %v1306
    %v1308 = vpop.f32.mrb[0].mxu0
    %v1309 = vadd.f32 %v1241, %v1308
    %v1310 = vpop.f32.mrb[0].mxu0
    %v1311 = vadd.f32 %v1241, %v1310
    %1312 = vmatprep.mubr.bf16.mxu0 0
    %1313 = vmatmul.mubr.bf16.gmra.mrb[0].mxu0 %v1268
    %v1314 = vpop.f32.mrb[0].mxu0
    %v1315 = vadd.f32 %v1246, %v1314
    %v1316 = vpop.f32.mrb[0].mxu0
    %v1317 = vadd.f32 %v1246, %v1316
    %v1318 = vpop.f32.mrb[0].mxu0
    %v1319 = vadd.f32 %v1251, %v1318
    %v1320 = vpop.f32.mrb[0].mxu0
    %v1321 = vadd.f32 %v1251, %v1320
    %1322 = vdwg.mxu0
    %1323 = vmatprep.subr.bf16.mxu0 %v1207
    %1324 = vmatpush1.bf16.msra.mxu0 %v1206
    %1325 = vmatprep.subr.bf16.mxu0 %v1211
    %1326 = vmatpush1.bf16.msra.mxu0 %v1210
    %1327 = vmatprep.subr.bf16.mxu0 %v1215
    %1328 = vmatpush1.bf16.msra.mxu0 %v1214
    %1329 = vmatprep.subr.bf16.mxu0 %v1219
    %1330 = vmatpush1.bf16.msra.mxu0 %v1218
    %1331 = vmatprep.subr.bf16.mxu0 %v1223
    %1332 = vmatpush1.bf16.msra.mxu0 %v1222
    %1333 = vmatprep.subr.bf16.mxu0 %v1227
    %1334 = vmatpush1.bf16.msra.mxu0 %v1226
    %1335 = vmatprep.subr.bf16.mxu0 0
    %1336 = vmatpush1.bf16.msra.mxu0 0
    %1337 = vmatprep.subr.bf16.mxu0 0
    %1338 = vmatpush1.bf16.msra.mxu0 0
    %1339 = vmatprep.subr.bf16.mxu0 0
    %1340 = vmatpush1.bf16.msra.mxu0 0
    %1341 = vmatprep.subr.bf16.mxu0 0
    %1342 = vmatpush1.bf16.msra.mxu0 0
    %1343 = vmatprep.subr.bf16.mxu0 0
    %1344 = vmatpush1.bf16.msra.mxu0 0
    %1345 = vmatprep.subr.bf16.mxu0 0
    %1346 = vmatpush1.bf16.msra.mxu0 0
    %1347 = vmatprep.subr.bf16.mxu0 0
    %1348 = vmatpush1.bf16.msra.mxu0 0
    %1349 = vmatprep.subr.bf16.mxu0 0
    %1350 = vmatpush1.bf16.msra.mxu0 0
    %1351 = vmatprep.subr.bf16.mxu0 0
    %1352 = vmatpush1.bf16.msra.mxu0 0
    %1353 = vmatprep.subr.bf16.mxu0 0
    %1354 = vmatpush1.bf16.msra.mxu0 0
    %1355 = vmatprep.mubr.bf16.mxu0 0
    %1356 = vmatmul.mubr.bf16.gmra.mrb[0].mxu0 %v1265
    %v1357 = vpop.f32.mrb[0].mxu0
    %v1358 = vadd.f32 %v1236, %v1357
    %v1359 = vpop.f32.mrb[0].mxu0
    %v1360 = vadd.f32 %v1236, %v1359
    %v1361 = vpop.f32.mrb[0].mxu0
    %v1362 = vadd.f32 %v1241, %v1361
    %v1363 = vpop.f32.mrb[0].mxu0
    %v1364 = vadd.f32 %v1241, %v1363
    %1365 = vmatprep.mubr.bf16.mxu0 0
    %1366 = vmatmul.mubr.bf16.gmra.mrb[0].mxu0 %v1268
    %v1367 = vpop.f32.mrb[0].mxu0
    %v1368 = vadd.f32 %v1246, %v1367
    %v1369 = vpop.f32.mrb[0].mxu0
    %v1370 = vadd.f32 %v1246, %v1369
    %v1371 = vpop.f32.mrb[0].mxu0
    %v1372 = vadd.f32 %v1251, %v1371
    %v1373 = vpop.f32.mrb[0].mxu0
    %v1374 = vadd.f32 %v1251, %v1373
    %1375 = vdwg.mxu0
    %v1376 = vmax.f32 %v1305, 0.0
    %v1377 = vmax.f32 %v1307, 0.0
    %v1378 = vmax.f32 %v1358, 0.0
    %v1379 = vmax.f32 %v1360, 0.0
    %v1380 = vmax.f32 %v1309, 0.0
    %v1381 = vmax.f32 %v1311, 0.0
    %v1382 = vmax.f32 %v1362, 0.0
    %v1383 = vmax.f32 %v1364, 0.0
    %v1384 = vmax.f32 %v1315, 0.0
    %v1385 = vmax.f32 %v1317, 0.0
    %v1386 = vmax.f32 %v1368, 0.0
    %v1387 = vmax.f32 %v1370, 0.0
    %v1388 = vmax.f32 %v1319, 0.0
    %v1389 = vmax.f32 %v1321, 0.0
    %v1390 = vmax.f32 %v1372, 0.0
    %v1391 = vmax.f32 %v1374, 0.0
    %v1392 = vadd.f32 %v1376, %v941
    %v1393 = vadd.f32 %v1377, %v942
    %v1394 = vadd.f32 %v1378, %v943
    %v1395 = vadd.f32 %v1379, %v944
    %v1396 = vadd.f32 %v1380, %v945
    %v1397 = vadd.f32 %v1381, %v946
    %v1398 = vadd.f32 %v1382, %v947
    %v1399 = vadd.f32 %v1383, %v948
    %v1400 = vadd.f32 %v1384, %v949
    %v1401 = vadd.f32 %v1385, %v950
    %v1402 = vadd.f32 %v1386, %v951
    %v1403 = vadd.f32 %v1387, %v952
    %v1404 = vadd.f32 %v1388, %v953
    %v1405 = vadd.f32 %v1389, %v954
    %v1406 = vadd.f32 %v1390, %v955
    %v1407 = vadd.f32 %v1391, %v956
    %v1408 = vpack.c.bf16 %v1396, %v1392
    %v1409 = vpack.c.bf16 %v1397, %v1393
    %v1410 = vpack.c.bf16 %v1398, %v1394
    %v1411 = vpack.c.bf16 %v1399, %v1395
    %v1412 = vpack.c.bf16 %v1404, %v1400
    %v1413 = vpack.c.bf16 %v1405, %v1401
    %v1414 = vpack.c.bf16 %v1406, %v1402
    %v1415 = vpack.c.bf16 %v1407, %v1403
    %1416 = vst [vmem:[#allocation2] sm:$0xff] %v1408
    %1417 = vst [vmem:[#allocation2 + $0x8] sm:$0xff] %v1409
    %1418 = vst [vmem:[#allocation2 + $0x10] sm:$0xff] %v1410
    %1419 = vst [vmem:[#allocation2 + $0x18] sm:$0xff] %v1411
    %1420 = vst [vmem:[#allocation2 + $0x20] sm:$0xff] %v1412
    %1421 = vst [vmem:[#allocation2 + $0x28] sm:$0xff] %v1413
    %1422 = vst [vmem:[#allocation2 + $0x30] sm:$0xff] %v1414
    %1423 = vst [vmem:[#allocation2 + $0x38] sm:$0xff] %v1415
    %1428 = vrot.lane.b32.xlu0 %v1395, 1
    %v1429 = vpop.permute.xlu0 %1428
    %1430 = vrot.lane.b32.xlu0 %v1399, 1
    %v1431 = vpop.permute.xlu0 %1430
    %1432 = vrot.lane.b32.xlu0 %v1403, 1
    %v1433 = vpop.permute.xlu0 %1432
    %1434 = vrot.lane.b32.xlu0 %v1407, 1
    %v1435 = vpop.permute.xlu0 %1434
    %1452 = vrot.lane.b32.xlu0 %v1392, 1
    %v1453 = vpop.permute.xlu0 %1452
    %1454 = vrot.lane.b32.xlu0 %v1393, 1
    %v1455 = vpop.permute.xlu0 %1454
    %1456 = vrot.lane.b32.xlu0 %v1394, 1
    %v1457 = vpop.permute.xlu0 %1456
    %1458 = vrot.lane.b32.xlu0 %v1396, 1
    %v1459 = vpop.permute.xlu0 %1458
    %1460 = vrot.lane.b32.xlu0 %v1397, 1
    %v1461 = vpop.permute.xlu0 %1460
    %1462 = vrot.lane.b32.xlu0 %v1398, 1
    %v1463 = vpop.permute.xlu0 %1462
    %1464 = vrot.lane.b32.xlu0 %v1400, 1
    %v1465 = vpop.permute.xlu0 %1464
    %1466 = vrot.lane.b32.xlu0 %v1401, 1
    %v1467 = vpop.permute.xlu0 %1466
    %1468 = vrot.lane.b32.xlu0 %v1402, 1
    %v1469 = vpop.permute.xlu0 %1468
    %1470 = vrot.lane.b32.xlu0 %v1404, 1
    %v1471 = vpop.permute.xlu0 %1470
    %1472 = vrot.lane.b32.xlu0 %v1405, 1
    %v1473 = vpop.permute.xlu0 %1472
    %1474 = vrot.lane.b32.xlu0 %v1406, 1
    %v1475 = vpop.permute.xlu0 %1474
    %v1476 = vsel %vm552, %v1453, %v1455
    %v1477 = vsel %vm552, %v1455, %v1457
    %v1478 = vsel %vm552, %v1457, %v1429
    %v1479 = vsel %vm552, %v1459, %v1461
    %v1480 = vsel %vm552, %v1461, %v1463
    %v1481 = vsel %vm552, %v1463, %v1431
    %v1482 = vsel %vm552, %v1465, %v1467
    %v1483 = vsel %vm552, %v1467, %v1469
    %v1484 = vsel %vm552, %v1469, %v1433
    %v1485 = vsel %vm552, %v1471, %v1473
    %v1486 = vsel %vm552, %v1473, %v1475
    %v1487 = vsel %vm552, %v1475, %v1435
    %v1504 = vsel %vm552, %v1429, %v1453
    %v1505 = vsel %vm552, %v1431, %v1459
    %v1506 = vsel %vm552, %v1433, %v1465
    %v1507 = vsel %vm552, %v1435, %v1471
    %v1508 = vsel %vm585, %v1504, 0.0
    %v1509 = vsel %vm586, %v1476, 0.0
    %v1510 = vsel %vm587, %v1477, 0.0
    %v1511 = vsel %vm588, %v1478, 0.0
    %v1512 = vsel %vm585, %v1505, 0.0
    %v1513 = vsel %vm586, %v1479, 0.0
    %v1514 = vsel %vm587, %v1480, 0.0
    %v1515 = vsel %vm588, %v1481, 0.0
    %v1516 = vsel %vm585, %v1506, 0.0
    %v1517 = vsel %vm586, %v1482, 0.0
    %v1518 = vsel %vm587, %v1483, 0.0
    %v1519 = vsel %vm588, %v1484, 0.0
    %v1520 = vsel %vm585, %v1507, 0.0
    %v1521 = vsel %vm586, %v1485, 0.0
    %v1522 = vsel %vm587, %v1486, 0.0
    %v1523 = vsel %vm588, %v1487, 0.0
    %v1524 = vpack.c.bf16 %v1512, %v1508
    %v1525 = vpack.c.bf16 %v1513, %v1509
    %v1526 = vpack.c.bf16 %v1514, %v1510
    %v1527 = vpack.c.bf16 %v1515, %v1511
    %v1528 = vpack.c.bf16 %v1520, %v1516
    %v1529 = vpack.c.bf16 %v1521, %v1517
    %v1530 = vpack.c.bf16 %v1522, %v1518
    %v1531 = vpack.c.bf16 %v1523, %v1519
    %1532 = vst [vmem:[#allocation2 + $0x40] sm:$0xff] %v1524
    %1533 = vst [vmem:[#allocation2 + $0x48] sm:$0xff] %v1525
    %1534 = vst [vmem:[#allocation2 + $0x50] sm:$0xff] %v1526
    %1535 = vst [vmem:[#allocation2 + $0x58] sm:$0xff] %v1527
    %1536 = vst [vmem:[#allocation2 + $0x60] sm:$0xff] %v1528
    %1537 = vst [vmem:[#allocation2 + $0x68] sm:$0xff] %v1529
    %1538 = vst [vmem:[#allocation2 + $0x70] sm:$0xff] %v1530
    %1539 = vst [vmem:[#allocation2 + $0x78] sm:$0xff] %v1531
    %1540 = vrot.lane.b32.xlu0 %v1392, 127
    %v1541 = vpop.permute.xlu0 %1540
    %1542 = vrot.lane.b32.xlu0 %v1393, 127
    %v1543 = vpop.permute.xlu0 %1542
    %1544 = vrot.lane.b32.xlu0 %v1394, 127
    %v1545 = vpop.permute.xlu0 %1544
    %1546 = vrot.lane.b32.xlu0 %v1395, 127
    %v1547 = vpop.permute.xlu0 %1546
    %1548 = vrot.lane.b32.xlu0 %v1396, 127
    %v1549 = vpop.permute.xlu0 %1548
    %1550 = vrot.lane.b32.xlu0 %v1397, 127
    %v1551 = vpop.permute.xlu0 %1550
    %1552 = vrot.lane.b32.xlu0 %v1398, 127
    %v1553 = vpop.permute.xlu0 %1552
    %1554 = vrot.lane.b32.xlu0 %v1399, 127
    %v1555 = vpop.permute.xlu0 %1554
    %1556 = vrot.lane.b32.xlu0 %v1400, 127
    %v1557 = vpop.permute.xlu0 %1556
    %1558 = vrot.lane.b32.xlu0 %v1401, 127
    %v1559 = vpop.permute.xlu0 %1558
    %1560 = vrot.lane.b32.xlu0 %v1402, 127
    %v1561 = vpop.permute.xlu0 %1560
    %1562 = vrot.lane.b32.xlu0 %v1403, 127
    %v1563 = vpop.permute.xlu0 %1562
    %1564 = vrot.lane.b32.xlu0 %v1404, 127
    %v1565 = vpop.permute.xlu0 %1564
    %1566 = vrot.lane.b32.xlu0 %v1405, 127
    %v1567 = vpop.permute.xlu0 %1566
    %1568 = vrot.lane.b32.xlu0 %v1406, 127
    %v1569 = vpop.permute.xlu0 %1568
    %1570 = vrot.lane.b32.xlu0 %v1407, 127
    %v1571 = vpop.permute.xlu0 %1570
    %v1572 = vsel %vm653, %v1541, %v1543
    %v1573 = vsel %vm653, %v1543, %v1545
    %v1574 = vsel %vm653, %v1545, %v1547
    %v1575 = vsel %vm653, %v1549, %v1551
    %v1576 = vsel %vm653, %v1551, %v1553
    %v1577 = vsel %vm653, %v1553, %v1555
    %v1578 = vsel %vm653, %v1557, %v1559
    %v1579 = vsel %vm653, %v1559, %v1561
    %v1580 = vsel %vm653, %v1561, %v1563
    %v1581 = vsel %vm653, %v1565, %v1567
    %v1582 = vsel %vm653, %v1567, %v1569
    %v1583 = vsel %vm653, %v1569, %v1571
    %v1604 = vsel %vm653, %v1547, %v1541
    %v1605 = vsel %vm653, %v1555, %v1549
    %v1606 = vsel %vm653, %v1563, %v1557
    %v1607 = vsel %vm653, %v1571, %v1565
    %v1608 = vsel %vm690, %v1572, 0.0
    %v1609 = vsel %vm691, %v1573, 0.0
    %v1610 = vsel %vm692, %v1574, 0.0
    %v1611 = vsel %vm693, %v1604, 0.0
    %v1612 = vsel %vm690, %v1575, 0.0
    %v1613 = vsel %vm691, %v1576, 0.0
    %v1614 = vsel %vm692, %v1577, 0.0
    %v1615 = vsel %vm693, %v1605, 0.0
    %v1616 = vsel %vm690, %v1578, 0.0
    %v1617 = vsel %vm691, %v1579, 0.0
    %v1618 = vsel %vm692, %v1580, 0.0
    %v1619 = vsel %vm693, %v1606, 0.0
    %v1620 = vsel %vm690, %v1581, 0.0
    %v1621 = vsel %vm691, %v1582, 0.0
    %v1622 = vsel %vm692, %v1583, 0.0
    %v1623 = vsel %vm693, %v1607, 0.0
    %v1624 = vpack.c.bf16 %v1612, %v1608
    %v1625 = vpack.c.bf16 %v1613, %v1609
    %v1626 = vpack.c.bf16 %v1614, %v1610
    %v1627 = vpack.c.bf16 %v1615, %v1611
    %v1628 = vpack.c.bf16 %v1620, %v1616
    %v1629 = vpack.c.bf16 %v1621, %v1617
    %v1630 = vpack.c.bf16 %v1622, %v1618
    %v1631 = vpack.c.bf16 %v1623, %v1619
    %1632 = vst [vmem:[#allocation2 + $0x80] sm:$0xff] %v1624
    %1633 = vst [vmem:[#allocation2 + $0x88] sm:$0xff] %v1625
    %1634 = vst [vmem:[#allocation2 + $0x90] sm:$0xff] %v1626
    %1635 = vst [vmem:[#allocation2 + $0x98] sm:$0xff] %v1627
    %1636 = vst [vmem:[#allocation2 + $0xa0] sm:$0xff] %v1628
    %1637 = vst [vmem:[#allocation2 + $0xa8] sm:$0xff] %v1629
    %1638 = vst [vmem:[#allocation2 + $0xb0] sm:$0xff] %v1630
    %1639 = vst [vmem:[#allocation2 + $0xb8] sm:$0xff] %v1631
    %1640 = vrot.lane.b32.xlu0 %v1395, 4
    %v1641 = vpop.permute.xlu0 %1640
    %1642 = vrot.lane.b32.xlu0 %v1399, 4
    %v1643 = vpop.permute.xlu0 %1642
    %1644 = vrot.lane.b32.xlu0 %v1403, 4
    %v1645 = vpop.permute.xlu0 %1644
    %1646 = vrot.lane.b32.xlu0 %v1407, 4
    %v1647 = vpop.permute.xlu0 %1646
    %1652 = vrot.lane.b32.xlu0 %v1392, 4
    %v1653 = vpop.permute.xlu0 %1652
    %1654 = vrot.lane.b32.xlu0 %v1393, 4
    %v1655 = vpop.permute.xlu0 %1654
    %1656 = vrot.lane.b32.xlu0 %v1394, 4
    %v1657 = vpop.permute.xlu0 %1656
    %1658 = vrot.lane.b32.xlu0 %v1396, 4
    %v1659 = vpop.permute.xlu0 %1658
    %1660 = vrot.lane.b32.xlu0 %v1397, 4
    %v1661 = vpop.permute.xlu0 %1660
    %1662 = vrot.lane.b32.xlu0 %v1398, 4
    %v1663 = vpop.permute.xlu0 %1662
    %1664 = vrot.lane.b32.xlu0 %v1400, 4
    %v1665 = vpop.permute.xlu0 %1664
    %1666 = vrot.lane.b32.xlu0 %v1401, 4
    %v1667 = vpop.permute.xlu0 %1666
    %1668 = vrot.lane.b32.xlu0 %v1402, 4
    %v1669 = vpop.permute.xlu0 %1668
    %1670 = vrot.lane.b32.xlu0 %v1404, 4
    %v1671 = vpop.permute.xlu0 %1670
    %1672 = vrot.lane.b32.xlu0 %v1405, 4
    %v1673 = vpop.permute.xlu0 %1672
    %1674 = vrot.lane.b32.xlu0 %v1406, 4
    %v1675 = vpop.permute.xlu0 %1674
    %v1676 = vsel %vm342, %v1653, %v1655
    %v1677 = vsel %vm342, %v1655, %v1657
    %v1678 = vsel %vm342, %v1657, %v1641
    %v1679 = vsel %vm342, %v1659, %v1661
    %v1680 = vsel %vm342, %v1661, %v1663
    %v1681 = vsel %vm342, %v1663, %v1643
    %v1682 = vsel %vm342, %v1665, %v1667
    %v1683 = vsel %vm342, %v1667, %v1669
    %v1684 = vsel %vm342, %v1669, %v1645
    %v1685 = vsel %vm342, %v1671, %v1673
    %v1686 = vsel %vm342, %v1673, %v1675
    %v1687 = vsel %vm342, %v1675, %v1647
    %v1704 = vsel %vm342, %v1641, %v1653
    %v1705 = vsel %vm342, %v1643, %v1659
    %v1706 = vsel %vm342, %v1645, %v1665
    %v1707 = vsel %vm342, %v1647, %v1671
    %v1708 = vsel %vm375, %v1704, 0.0
    %v1709 = vsel %vm376, %v1676, 0.0
    %v1710 = vsel %vm377, %v1677, 0.0
    %v1711 = vsel %vm378, %v1678, 0.0
    %v1712 = vsel %vm375, %v1705, 0.0
    %v1713 = vsel %vm376, %v1679, 0.0
    %v1714 = vsel %vm377, %v1680, 0.0
    %v1715 = vsel %vm378, %v1681, 0.0
    %v1716 = vsel %vm375, %v1706, 0.0
    %v1717 = vsel %vm376, %v1682, 0.0
    %v1718 = vsel %vm377, %v1683, 0.0
    %v1719 = vsel %vm378, %v1684, 0.0
    %v1720 = vsel %vm375, %v1707, 0.0
    %v1721 = vsel %vm376, %v1685, 0.0
    %v1722 = vsel %vm377, %v1686, 0.0
    %v1723 = vsel %vm378, %v1687, 0.0
    %v1724 = vpack.c.bf16 %v1712, %v1708
    %v1725 = vpack.c.bf16 %v1713, %v1709
    %v1726 = vpack.c.bf16 %v1714, %v1710
    %v1727 = vpack.c.bf16 %v1715, %v1711
    %v1728 = vpack.c.bf16 %v1720, %v1716
    %v1729 = vpack.c.bf16 %v1721, %v1717
    %v1730 = vpack.c.bf16 %v1722, %v1718
    %v1731 = vpack.c.bf16 %v1723, %v1719
    %1732 = vst [vmem:[#allocation2 + $0xc0] sm:$0xff] %v1724
    %1733 = vst [vmem:[#allocation2 + $0xc8] sm:$0xff] %v1725
    %1734 = vst [vmem:[#allocation2 + $0xd0] sm:$0xff] %v1726
    %1735 = vst [vmem:[#allocation2 + $0xd8] sm:$0xff] %v1727
    %1736 = vst [vmem:[#allocation2 + $0xe0] sm:$0xff] %v1728
    %1737 = vst [vmem:[#allocation2 + $0xe8] sm:$0xff] %v1729
    %1738 = vst [vmem:[#allocation2 + $0xf0] sm:$0xff] %v1730
    %1739 = vst [vmem:[#allocation2 + $0xf8] sm:$0xff] %v1731
    %1740 = vrot.lane.b32.xlu0 %v1392, 124
    %v1741 = vpop.permute.xlu0 %1740
    %1742 = vrot.lane.b32.xlu0 %v1393, 124
    %v1743 = vpop.permute.xlu0 %1742
    %1744 = vrot.lane.b32.xlu0 %v1394, 124
    %v1745 = vpop.permute.xlu0 %1744
    %1746 = vrot.lane.b32.xlu0 %v1395, 124
    %v1747 = vpop.permute.xlu0 %1746
    %1748 = vrot.lane.b32.xlu0 %v1396, 124
    %v1749 = vpop.permute.xlu0 %1748
    %1750 = vrot.lane.b32.xlu0 %v1397, 124
    %v1751 = vpop.permute.xlu0 %1750
    %1752 = vrot.lane.b32.xlu0 %v1398, 124
    %v1753 = vpop.permute.xlu0 %1752
    %1754 = vrot.lane.b32.xlu0 %v1399, 124
    %v1755 = vpop.permute.xlu0 %1754
    %1756 = vrot.lane.b32.xlu0 %v1400, 124
    %v1757 = vpop.permute.xlu0 %1756
    %1758 = vrot.lane.b32.xlu0 %v1401, 124
    %v1759 = vpop.permute.xlu0 %1758
    %1760 = vrot.lane.b32.xlu0 %v1402, 124
    %v1761 = vpop.permute.xlu0 %1760
    %1762 = vrot.lane.b32.xlu0 %v1403, 124
    %v1763 = vpop.permute.xlu0 %1762
    %1764 = vrot.lane.b32.xlu0 %v1404, 124
    %v1765 = vpop.permute.xlu0 %1764
    %1766 = vrot.lane.b32.xlu0 %v1405, 124
    %v1767 = vpop.permute.xlu0 %1766
    %1768 = vrot.lane.b32.xlu0 %v1406, 124
    %v1769 = vpop.permute.xlu0 %1768
    %1770 = vrot.lane.b32.xlu0 %v1407, 124
    %v1771 = vpop.permute.xlu0 %1770
    %v1772 = vsel %vm443, %v1741, %v1743
    %v1773 = vsel %vm443, %v1743, %v1745
    %v1774 = vsel %vm443, %v1745, %v1747
    %v1775 = vsel %vm443, %v1749, %v1751
    %v1776 = vsel %vm443, %v1751, %v1753
    %v1777 = vsel %vm443, %v1753, %v1755
    %v1778 = vsel %vm443, %v1757, %v1759
    %v1779 = vsel %vm443, %v1759, %v1761
    %v1780 = vsel %vm443, %v1761, %v1763
    %v1781 = vsel %vm443, %v1765, %v1767
    %v1782 = vsel %vm443, %v1767, %v1769
    %v1783 = vsel %vm443, %v1769, %v1771
    %v1804 = vsel %vm443, %v1747, %v1741
    %v1805 = vsel %vm443, %v1755, %v1749
    %v1806 = vsel %vm443, %v1763, %v1757
    %v1807 = vsel %vm443, %v1771, %v1765
    %v1808 = vsel %vm480, %v1772, 0.0
    %v1809 = vsel %vm481, %v1773, 0.0
    %v1810 = vsel %vm482, %v1774, 0.0
    %v1811 = vsel %vm483, %v1804, 0.0
    %v1812 = vsel %vm480, %v1775, 0.0
    %v1813 = vsel %vm481, %v1776, 0.0
    %v1814 = vsel %vm482, %v1777, 0.0
    %v1815 = vsel %vm483, %v1805, 0.0
    %v1816 = vsel %vm480, %v1778, 0.0
    %v1817 = vsel %vm481, %v1779, 0.0
    %v1818 = vsel %vm482, %v1780, 0.0
    %v1819 = vsel %vm483, %v1806, 0.0
    %v1820 = vsel %vm480, %v1781, 0.0
    %v1821 = vsel %vm481, %v1782, 0.0
    %v1822 = vsel %vm482, %v1783, 0.0
    %v1823 = vsel %vm483, %v1807, 0.0
    %v1824 = vpack.c.bf16 %v1812, %v1808
    %v1825 = vpack.c.bf16 %v1813, %v1809
    %v1826 = vpack.c.bf16 %v1814, %v1810
    %v1827 = vpack.c.bf16 %v1815, %v1811
    %v1828 = vpack.c.bf16 %v1820, %v1816
    %v1829 = vpack.c.bf16 %v1821, %v1817
    %v1830 = vpack.c.bf16 %v1822, %v1818
    %v1831 = vpack.c.bf16 %v1823, %v1819
    %1832 = vst [vmem:[#allocation2 + $0x100] sm:$0xff] %v1824
    %1833 = vst [vmem:[#allocation2 + $0x108] sm:$0xff] %v1825
    %1834 = vst [vmem:[#allocation2 + $0x110] sm:$0xff] %v1826
    %1835 = vst [vmem:[#allocation2 + $0x118] sm:$0xff] %v1827
    %1836 = vst [vmem:[#allocation2 + $0x120] sm:$0xff] %v1828
    %1837 = vst [vmem:[#allocation2 + $0x128] sm:$0xff] %v1829
    %1838 = vst [vmem:[#allocation2 + $0x130] sm:$0xff] %v1830
    %1839 = vst [vmem:[#allocation2 + $0x138] sm:$0xff] %v1831
    %s1840 = scalar_lea.vmem %s3, 64
    %v1841 = vld [vmem:[%s1840] sm:$0xff]
    %v1842 = vld [vmem:[%s1840 + $0x8] sm:$0xff]
    %v1843 = vld [vmem:[%s1840 + $0x10] sm:$0xff]
    %v1844 = vld [vmem:[%s1840 + $0x18] sm:$0xff]
    %v1845 = vld [vmem:[#allocation2] sm:$0xff]
    %v1846 = vld [vmem:[#allocation2 + $0x8] sm:$0xff]
    %v1847 = vld [vmem:[#allocation2 + $0x10] sm:$0xff]
    %v1848 = vld [vmem:[#allocation2 + $0x18] sm:$0xff]
    %v1849 = vld [vmem:[#allocation2 + $0x20] sm:$0xff]
    %v1850 = vld [vmem:[#allocation2 + $0x28] sm:$0xff]
    %v1851 = vld [vmem:[#allocation2 + $0x30] sm:$0xff]
    %v1852 = vld [vmem:[#allocation2 + $0x38] sm:$0xff]
    %v1853 = vld [vmem:[#allocation2 + $0x40] sm:$0xff]
    %v1854 = vld [vmem:[#allocation2 + $0x48] sm:$0xff]
    %v1855 = vld [vmem:[#allocation2 + $0x50] sm:$0xff]
    %v1856 = vld [vmem:[#allocation2 + $0x58] sm:$0xff]
    %v1857 = vld [vmem:[#allocation2 + $0x60] sm:$0xff]
    %v1858 = vld [vmem:[#allocation2 + $0x68] sm:$0xff]
    %v1859 = vld [vmem:[#allocation2 + $0x70] sm:$0xff]
    %v1860 = vld [vmem:[#allocation2 + $0x78] sm:$0xff]
    %v1861 = vld [vmem:[#allocation2 + $0x80] sm:$0xff]
    %v1862 = vld [vmem:[#allocation2 + $0x88] sm:$0xff]
    %v1863 = vld [vmem:[#allocation2 + $0x90] sm:$0xff]
    %v1864 = vld [vmem:[#allocation2 + $0x98] sm:$0xff]
    %v1865 = vld [vmem:[#allocation2 + $0xa0] sm:$0xff]
    %v1866 = vld [vmem:[#allocation2 + $0xa8] sm:$0xff]
    %v1867 = vld [vmem:[#allocation2 + $0xb0] sm:$0xff]
    %v1868 = vld [vmem:[#allocation2 + $0xb8] sm:$0xff]
    %v1869 = vld [vmem:[#allocation2 + $0xc0] sm:$0xff]
    %v1870 = vld [vmem:[#allocation2 + $0xc8] sm:$0xff]
    %v1871 = vld [vmem:[#allocation2 + $0xd0] sm:$0xff]
    %v1872 = vld [vmem:[#allocation2 + $0xd8] sm:$0xff]
    %v1873 = vld [vmem:[#allocation2 + $0xe0] sm:$0xff]
    %v1874 = vld [vmem:[#allocation2 + $0xe8] sm:$0xff]
    %v1875 = vld [vmem:[#allocation2 + $0xf0] sm:$0xff]
    %v1876 = vld [vmem:[#allocation2 + $0xf8] sm:$0xff]
    %v1877 = vld [vmem:[#allocation2 + $0x100] sm:$0xff]
    %v1878 = vld [vmem:[#allocation2 + $0x108] sm:$0xff]
    %v1879 = vld [vmem:[#allocation2 + $0x110] sm:$0xff]
    %v1880 = vld [vmem:[#allocation2 + $0x118] sm:$0xff]
    %v1881 = vld [vmem:[#allocation2 + $0x120] sm:$0xff]
    %v1882 = vld [vmem:[#allocation2 + $0x128] sm:$0xff]
    %v1883 = vld [vmem:[#allocation2 + $0x130] sm:$0xff]
    %v1884 = vld [vmem:[#allocation2 + $0x138] sm:$0xff]
    %s1885 = scalar_lea.vmem %s4, 64
    %v1886 = vld [vmem:[%s1885] sm:$0xff]
    %v1887 = vld [vmem:[%s1885 + $0x8] sm:$0xff]
    %v1888 = vld [vmem:[%s1885 + $0x10] sm:$0xff]
    %v1889 = vld [vmem:[%s1885 + $0x18] sm:$0xff]
    %1891 = vset.pattern.permute.xlu0 0
    %1892 = vperm.xlu0 %1891, %v1886
    %v1893 = vpop.permute.xlu0 %1892
    %1896 = vset.pattern.permute.xlu0 0
    %1897 = vperm.xlu0 %1896, %v1887
    %v1898 = vpop.permute.xlu0 %1897
    %1901 = vset.pattern.permute.xlu0 0
    %1902 = vperm.xlu0 %1901, %v1888
    %v1903 = vpop.permute.xlu0 %1902
    %1906 = vset.pattern.permute.xlu0 0
    %1907 = vperm.xlu0 %1906, %v1889
    %v1908 = vpop.permute.xlu0 %1907
    %v1914 = vunpack.c.l.b16 %v1841
    %v1915 = vunpack.c.h.b16 %v1841
    %v1916 = vunpack.c.l.b16 %v1842
    %v1917 = vunpack.c.h.b16 %v1842
    %v1918 = vunpack.c.l.b16 %v1843
    %v1919 = vunpack.c.h.b16 %v1843
    %v1920 = vunpack.c.l.b16 %v1844
    %v1921 = vunpack.c.h.b16 %v1844
    %v1922 = vpack.c.b16 %v1916, %v1914
    %v1923 = vpack.c.b16 %v1917, %v1915
    %v1924 = vpack.c.b16 %v1920, %v1918
    %v1925 = vpack.c.b16 %v1921, %v1919
    %v1929 = vsel %vm812, %v1923, 0
    %v1932 = vsel %vm812, %v1925, 0
    %1934 = vmatprep.subr.bf16.mxu0 %v1846
    %1935 = vmatpush1.bf16.msra.mxu0 %v1845
    %1936 = vmatprep.subr.bf16.mxu0 %v1850
    %1937 = vmatpush1.bf16.msra.mxu0 %v1849
    %1938 = vmatprep.subr.bf16.mxu0 %v1854
    %1939 = vmatpush1.bf16.msra.mxu0 %v1853
    %1940 = vmatprep.subr.bf16.mxu0 %v1858
    %1941 = vmatpush1.bf16.msra.mxu0 %v1857
    %1942 = vmatprep.subr.bf16.mxu0 %v1862
    %1943 = vmatpush1.bf16.msra.mxu0 %v1861
    %1944 = vmatprep.subr.bf16.mxu0 %v1866
    %1945 = vmatpush1.bf16.msra.mxu0 %v1865
    %1946 = vmatprep.subr.bf16.mxu0 %v1870
    %1947 = vmatpush1.bf16.msra.mxu0 %v1869
    %1948 = vmatprep.subr.bf16.mxu0 %v1874
    %1949 = vmatpush1.bf16.msra.mxu0 %v1873
    %1950 = vmatprep.subr.bf16.mxu0 %v1878
    %1951 = vmatpush1.bf16.msra.mxu0 %v1877
    %1952 = vmatprep.subr.bf16.mxu0 %v1882
    %1953 = vmatpush1.bf16.msra.mxu0 %v1881
    %1954 = vmatprep.subr.bf16.mxu0 0
    %1955 = vmatpush1.bf16.msra.mxu0 0
    %1956 = vmatprep.subr.bf16.mxu0 0
    %1957 = vmatpush1.bf16.msra.mxu0 0
    %1958 = vmatprep.subr.bf16.mxu0 0
    %1959 = vmatpush1.bf16.msra.mxu0 0
    %1960 = vmatprep.subr.bf16.mxu0 0
    %1961 = vmatpush1.bf16.msra.mxu0 0
    %1962 = vmatprep.subr.bf16.mxu0 0
    %1963 = vmatpush1.bf16.msra.mxu0 0
    %1964 = vmatprep.subr.bf16.mxu0 0
    %1965 = vmatpush1.bf16.msra.mxu0 0
    %1966 = vmatprep.mubr.bf16.mxu0 %v1929
    %1967 = vmatmul.mubr.bf16.gmra.mrb[0].mxu0 %v1922
    %v1968 = vpop.f32.mrb[0].mxu0
    %v1969 = vadd.f32 %v1893, %v1968
    %v1970 = vpop.f32.mrb[0].mxu0
    %v1971 = vadd.f32 %v1893, %v1970
    %v1972 = vpop.f32.mrb[0].mxu0
    %v1973 = vadd.f32 %v1898, %v1972
    %v1974 = vpop.f32.mrb[0].mxu0
    %v1975 = vadd.f32 %v1898, %v1974
    %1976 = vmatprep.mubr.bf16.mxu0 %v1932
    %1977 = vmatmul.mubr.bf16.gmra.mrb[0].mxu0 %v1924
    %v1978 = vpop.f32.mrb[0].mxu0
    %v1979 = vadd.f32 %v1903, %v1978
    %v1980 = vpop.f32.mrb[0].mxu0
    %v1981 = vadd.f32 %v1903, %v1980
    %v1982 = vpop.f32.mrb[0].mxu0
    %v1983 = vadd.f32 %v1908, %v1982
    %v1984 = vpop.f32.mrb[0].mxu0
    %v1985 = vadd.f32 %v1908, %v1984
    %1986 = vdwg.mxu0
    %1987 = vmatprep.subr.bf16.mxu0 %v1848
    %1988 = vmatpush1.bf16.msra.mxu0 %v1847
    %1989 = vmatprep.subr.bf16.mxu0 %v1852
    %1990 = vmatpush1.bf16.msra.mxu0 %v1851
    %1991 = vmatprep.subr.bf16.mxu0 %v1856
    %1992 = vmatpush1.bf16.msra.mxu0 %v1855
    %1993 = vmatprep.subr.bf16.mxu0 %v1860
    %1994 = vmatpush1.bf16.msra.mxu0 %v1859
    %1995 = vmatprep.subr.bf16.mxu0 %v1864
    %1996 = vmatpush1.bf16.msra.mxu0 %v1863
    %1997 = vmatprep.subr.bf16.mxu0 %v1868
    %1998 = vmatpush1.bf16.msra.mxu0 %v1867
    %1999 = vmatprep.subr.bf16.mxu0 %v1872
    %2000 = vmatpush1.bf16.msra.mxu0 %v1871
    %2001 = vmatprep.subr.bf16.mxu0 %v1876
    %2002 = vmatpush1.bf16.msra.mxu0 %v1875
    %2003 = vmatprep.subr.bf16.mxu0 %v1880
    %2004 = vmatpush1.bf16.msra.mxu0 %v1879
    %2005 = vmatprep.subr.bf16.mxu0 %v1884
    %2006 = vmatpush1.bf16.msra.mxu0 %v1883
    %2007 = vmatprep.subr.bf16.mxu0 0
    %2008 = vmatpush1.bf16.msra.mxu0 0
    %2009 = vmatprep.subr.bf16.mxu0 0
    %2010 = vmatpush1.bf16.msra.mxu0 0
    %2011 = vmatprep.subr.bf16.mxu0 0
    %2012 = vmatpush1.bf16.msra.mxu0 0
    %2013 = vmatprep.subr.bf16.mxu0 0
    %2014 = vmatpush1.bf16.msra.mxu0 0
    %2015 = vmatprep.subr.bf16.mxu0 0
    %2016 = vmatpush1.bf16.msra.mxu0 0
    %2017 = vmatprep.subr.bf16.mxu0 0
    %2018 = vmatpush1.bf16.msra.mxu0 0
    %2019 = vmatprep.mubr.bf16.mxu0 %v1929
    %2020 = vmatmul.mubr.bf16.gmra.mrb[0].mxu0 %v1922
    %v2021 = vpop.f32.mrb[0].mxu0
    %v2022 = vadd.f32 %v1893, %v2021
    %v2023 = vpop.f32.mrb[0].mxu0
    %v2024 = vadd.f32 %v1893, %v2023
    %v2025 = vpop.f32.mrb[0].mxu0
    %v2026 = vadd.f32 %v1898, %v2025
    %v2027 = vpop.f32.mrb[0].mxu0
    %v2028 = vadd.f32 %v1898, %v2027
    %2029 = vmatprep.mubr.bf16.mxu0 %v1932
    %2030 = vmatmul.mubr.bf16.gmra.mrb[0].mxu0 %v1924
    %v2031 = vpop.f32.mrb[0].mxu0
    %v2032 = vadd.f32 %v1903, %v2031
    %v2033 = vpop.f32.mrb[0].mxu0
    %v2034 = vadd.f32 %v1903, %v2033
    %v2035 = vpop.f32.mrb[0].mxu0
    %v2036 = vadd.f32 %v1908, %v2035
    %v2037 = vpop.f32.mrb[0].mxu0
    %v2038 = vadd.f32 %v1908, %v2037
    %2039 = vdwg.mxu0
    %v2040 = vmax.f32 %v1969, 0.0
    %v2041 = vmax.f32 %v1971, 0.0
    %v2042 = vmax.f32 %v2022, 0.0
    %v2043 = vmax.f32 %v2024, 0.0
    %v2044 = vmax.f32 %v1973, 0.0
    %v2045 = vmax.f32 %v1975, 0.0
    %v2046 = vmax.f32 %v2026, 0.0
    %v2047 = vmax.f32 %v2028, 0.0
    %v2048 = vmax.f32 %v1979, 0.0
    %v2049 = vmax.f32 %v1981, 0.0
    %v2050 = vmax.f32 %v2032, 0.0
    %v2051 = vmax.f32 %v2034, 0.0
    %v2052 = vmax.f32 %v1983, 0.0
    %v2053 = vmax.f32 %v1985, 0.0
    %v2054 = vmax.f32 %v2036, 0.0
    %v2055 = vmax.f32 %v2038, 0.0
    %v2056 = vadd.f32 %v2040, %v1392
    %v2057 = vadd.f32 %v2041, %v1393
    %v2058 = vadd.f32 %v2042, %v1394
    %v2059 = vadd.f32 %v2043, %v1395
    %v2060 = vadd.f32 %v2044, %v1396
    %v2061 = vadd.f32 %v2045, %v1397
    %v2062 = vadd.f32 %v2046, %v1398
    %v2063 = vadd.f32 %v2047, %v1399
    %v2064 = vadd.f32 %v2048, %v1400
    %v2065 = vadd.f32 %v2049, %v1401
    %v2066 = vadd.f32 %v2050, %v1402
    %v2067 = vadd.f32 %v2051, %v1403
    %v2068 = vadd.f32 %v2052, %v1404
    %v2069 = vadd.f32 %v2053, %v1405
    %v2070 = vadd.f32 %v2054, %v1406
    %v2071 = vadd.f32 %v2055, %v1407
    %v2072 = vld [vmem:[%s5] sm:$0xf]
    %v2073 = vld [vmem:[%s5 + $0x4] sm:$0xf]
    %v2074 = vpack.c.bf16 %v2060, %v2056
    %v2075 = vpack.c.bf16 %v2061, %v2057
    %v2076 = vpack.c.bf16 %v2062, %v2058
    %v2077 = vpack.c.bf16 %v2063, %v2059
    %v2078 = vpack.c.bf16 %v2068, %v2064
    %v2079 = vpack.c.bf16 %v2069, %v2065
    %v2080 = vpack.c.bf16 %v2070, %v2066
    %v2081 = vpack.c.bf16 %v2071, %v2067
    %v2082 = vld [vmem:[%s6] sm:$0xff]
    %v2083 = vld [vmem:[%s6 + $0x8] sm:$0xff]
    %2085 = vset.pattern.permute.xlu0 0
    %2086 = vperm.xlu0 %2085, %v2082
    %v2087 = vpop.permute.xlu0 %2086
    %2090 = vset.pattern.permute.xlu0 0
    %2091 = vperm.xlu0 %2090, %v2083
    %v2092 = vpop.permute.xlu0 %2091
    %v2096 = vunpack.c.l.b16 %v2072
    %v2097 = vunpack.c.l.b16 %v2073
    %v2098 = vpack.c.b16 %v2097, %v2096
    %v2100 = vsel %vm812, %v2098, 0
    %2102 = vmatprep.subr.bf16.mxu0 %v2075
    %2103 = vmatpush1.bf16.msra.mxu0 %v2074
    %2104 = vmatprep.subr.bf16.mxu0 %v2079
    %2105 = vmatpush1.bf16.msra.mxu0 %v2078
    %2106 = vmatprep.subr.bf16.mxu0 0
    %2107 = vmatpush1.bf16.msra.mxu0 0
    %2108 = vmatprep.subr.bf16.mxu0 0
    %2109 = vmatpush1.bf16.msra.mxu0 0
    %2110 = vmatprep.subr.bf16.mxu0 0
    %2111 = vmatpush1.bf16.msra.mxu0 0
    %2112 = vmatprep.subr.bf16.mxu0 0
    %2113 = vmatpush1.bf16.msra.mxu0 0
    %2114 = vmatprep.subr.bf16.mxu0 0
    %2115 = vmatpush1.bf16.msra.mxu0 0
    %2116 = vmatprep.subr.bf16.mxu0 0
    %2117 = vmatpush1.bf16.msra.mxu0 0
    %2118 = vmatprep.subr.bf16.mxu0 0
    %2119 = vmatpush1.bf16.msra.mxu0 0
    %2120 = vmatprep.subr.bf16.mxu0 0
    %2121 = vmatpush1.bf16.msra.mxu0 0
    %2122 = vmatprep.subr.bf16.mxu0 0
    %2123 = vmatpush1.bf16.msra.mxu0 0
    %2124 = vmatprep.subr.bf16.mxu0 0
    %2125 = vmatpush1.bf16.msra.mxu0 0
    %2126 = vmatprep.subr.bf16.mxu0 0
    %2127 = vmatpush1.bf16.msra.mxu0 0
    %2128 = vmatprep.subr.bf16.mxu0 0
    %2129 = vmatpush1.bf16.msra.mxu0 0
    %2130 = vmatprep.subr.bf16.mxu0 0
    %2131 = vmatpush1.bf16.msra.mxu0 0
    %2132 = vmatprep.subr.bf16.mxu0 0
    %2133 = vmatpush1.bf16.msra.mxu0 0
    %2134 = vmatprep.mubr.bf16.mxu0 0
    %2135 = vmatmul.mubr.bf16.gmra.mrb[0].mxu0 %v2100
    %v2136 = vpop.f32.mrb[0].mxu0
    %v2137 = vadd.f32 %v2087, %v2136
    %v2138 = vpop.f32.mrb[0].mxu0
    %v2139 = vadd.f32 %v2087, %v2138
    %v2140 = vpop.f32.mrb[0].mxu0
    %v2141 = vadd.f32 %v2092, %v2140
    %v2142 = vpop.f32.mrb[0].mxu0
    %v2143 = vadd.f32 %v2092, %v2142
    %2144 = vdwg.mxu0
    %2145 = vmatprep.subr.bf16.mxu0 %v2077
    %2146 = vmatpush1.bf16.msra.mxu0 %v2076
    %2147 = vmatprep.subr.bf16.mxu0 %v2081
    %2148 = vmatpush1.bf16.msra.mxu0 %v2080
    %2149 = vmatprep.subr.bf16.mxu0 0
    %2150 = vmatpush1.bf16.msra.mxu0 0
    %2151 = vmatprep.subr.bf16.mxu0 0
    %2152 = vmatpush1.bf16.msra.mxu0 0
    %2153 = vmatprep.subr.bf16.mxu0 0
    %2154 = vmatpush1.bf16.msra.mxu0 0
    %2155 = vmatprep.subr.bf16.mxu0 0
    %2156 = vmatpush1.bf16.msra.mxu0 0
    %2157 = vmatprep.subr.bf16.mxu0 0
    %2158 = vmatpush1.bf16.msra.mxu0 0
    %2159 = vmatprep.subr.bf16.mxu0 0
    %2160 = vmatpush1.bf16.msra.mxu0 0
    %2161 = vmatprep.subr.bf16.mxu0 0
    %2162 = vmatpush1.bf16.msra.mxu0 0
    %2163 = vmatprep.subr.bf16.mxu0 0
    %2164 = vmatpush1.bf16.msra.mxu0 0
    %2165 = vmatprep.subr.bf16.mxu0 0
    %2166 = vmatpush1.bf16.msra.mxu0 0
    %2167 = vmatprep.subr.bf16.mxu0 0
    %2168 = vmatpush1.bf16.msra.mxu0 0
    %2169 = vmatprep.subr.bf16.mxu0 0
    %2170 = vmatpush1.bf16.msra.mxu0 0
    %2171 = vmatprep.subr.bf16.mxu0 0
    %2172 = vmatpush1.bf16.msra.mxu0 0
    %2173 = vmatprep.subr.bf16.mxu0 0
    %2174 = vmatpush1.bf16.msra.mxu0 0
    %2175 = vmatprep.subr.bf16.mxu0 0
    %2176 = vmatpush1.bf16.msra.mxu0 0
    %2177 = vmatprep.mubr.bf16.mxu0 0
    %2178 = vmatmul.mubr.bf16.gmra.mrb[0].mxu0 %v2100
    %v2179 = vpop.f32.mrb[0].mxu0
    %v2180 = vadd.f32 %v2087, %v2179
    %v2181 = vpop.f32.mrb[0].mxu0
    %v2182 = vadd.f32 %v2087, %v2181
    %v2183 = vpop.f32.mrb[0].mxu0
    %v2184 = vadd.f32 %v2092, %v2183
    %v2185 = vpop.f32.mrb[0].mxu0
    %v2186 = vadd.f32 %v2092, %v2185
    %2187 = vdwg.mxu0
    %2188 = vst [vmem:[#allocation3] sm:$0xff] %v2137
    %2189 = vst [vmem:[#allocation3 + $0x8] sm:$0xff] %v2139
    %2190 = vst [vmem:[#allocation3 + $0x10] sm:$0xff] %v2141
    %2191 = vst [vmem:[#allocation3 + $0x18] sm:$0xff] %v2143
    %s2192 = scalar_lea.vmem [#allocation3], 32
    %2193 = vst [vmem:[%s2192] sm:$0xff] %v2180
    %2194 = vst [vmem:[%s2192 + $0x8] sm:$0xff] %v2182
    %2195 = vst [vmem:[%s2192 + $0x10] sm:$0xff] %v2184
    %2196 = vst [vmem:[%s2192 + $0x18] sm:$0xff] %v2186
    // Predicated region
    $region30: #{tpu_custom_call.1} parent=1 // pred_check
      _
    $region31: #{tpu_custom_call.1} parent=1 // pred_check_branch
      %2198 = sbr.rel (0) target = $region33
    $region32: #{tpu_custom_call.1} parent=1 // pred_region
      %s2200 = ssub.s32 1024, 1024
      %2201 = vsyncadd [#allocation4], %s2200
      %s2202 = sshll.u32 [#allocation3], 4
      %s2203 = int_to_ptr.vmem [resolvable:$true] %s2202
      %2208 = dma.vmem_to_hbm [thread:$0]  %s2203, 1024, %s7, [#allocation4], 256, 256, 16
    $region33: #{tpu_custom_call.1} parent=1 // pred_fallthru
      _
    // Predicated region
    $region34: #{tpu_custom_call.1} parent=1 // pred_check
      _
    $region35: #{tpu_custom_call.1} parent=1 // pred_check_branch
      %2210 = sbr.rel (0) target = $region37
    $region36: #{tpu_custom_call.1} parent=1 // pred_region
      %2211 = dma.done [#allocation4], 1024
    $region37: #{tpu_custom_call.1} parent=1 // pred_fallthru
      _
    %2212 = vsyncpa [#allocation4], 1

</llo_original>
